<compile_context>
chip_gen: v6e
topology: v6e:2x2x1
jax: 0.10.0
libtpu: 0.0.40
codegen_flags: <defaults>
</compile_context>

<pallas_src>
import jax
import jax.numpy as jnp
import numpy as np
from jax.experimental import pallas as pl
from jax.experimental.pallas import tpu as pltpu

# ----------------------------- config (small) --------------------------------
BS = 2            # batch size
N = 8             # num_nodes (kb length dimension)
D = 32            # emb_size  (memsize)
R = 3             # num_attrs (num relations)
ENC_HID = 16      # enc_hid_size -> qsize = 2 * ENC_HID
Q = 2 * ENC_HID   # qsize == 32
A = 16            # attn_size
HOPS = 2          # mem_hops

BN = BS * N       # 16: whole batch folded onto the sublane axis
NEG_INF = float(jnp.finfo(jnp.float32).min)

# Packed-weight row layout (per hop).  Every block starts at lane 0 and at a
# sublane offset that is a multiple of 8, so all in-kernel slices are aligned.
WCAT_ROWS = D                                   # [W_r0 | W_r1 | W_r2 | W_0] : (D, (R+1)*D)
W1_ROWS = D + Q                                 # [W1_mem ; W1_query]        : (D+Q, Q)
W2_ROWS = Q                                     #                              (Q, A)
W3_ROWS = A                                     #                              (A, 1)
HOP_ROWS = WCAT_ROWS + W1_ROWS + W2_ROWS + W3_ROWS   # 144
O_WCAT = 0
O_W1M = O_WCAT + WCAT_ROWS                      # 32
O_W1Q = O_W1M + D                               # 64
O_W2 = O_W1M + W1_ROWS                          # 96
O_W3 = O_W2 + W2_ROWS                           # 128


# ------------------------------- kernel --------------------------------------
def graph_reasoning_kernel(q_ref, data_ref, g_ref, wts_ref, q_out_ref, mem_out_ref):
    # memory_contents = kb_token_features + kb_type_features
    mem = data_ref[0:BN, :] + data_ref[BN:2 * BN, :]            # (BN, D)
    mask = data_ref[2 * BN:3 * BN, 0:1]                         # (BN, 1), 1.0 = valid

    # graph_norm: per-(batch, relation) row degrees clamped to >= 1.  The zero
    # off-diagonal blocks of the block-diag layout leave row sums unchanged.
    # Approx reciprocal rides the otherwise-idle EUP slot.
    g = g_ref[...]                                              # (R*BN, BN)
    deg = jnp.maximum(jnp.sum(g, axis=-1, keepdims=True), 1.0)
    g = g * pl.reciprocal(deg, approx=True)

    # ---- relational message passing hops ----
    #   relu( sum_r A_r @ mem @ W_r + mem @ W_0 )
    # = relu( sum_r A_r @ z_r + z_R ),  z = mem @ [W_r... | W_0]  (lane-dense)
    for hop in range(HOPS):
        base = hop * HOP_ROWS
        z = jnp.dot(mem, wts_ref[base + O_WCAT:base + O_WCAT + D, :],
                    preferred_element_type=jnp.float32)          # (BN, (R+1)*D)
        acc = z[:, R * D:(R + 1) * D]                            # mem @ W_0 term
        for r in range(R):
            acc = acc + jnp.dot(g[r * BN:(r + 1) * BN, :],
                                z[:, r * D:(r + 1) * D],
                                preferred_element_type=jnp.float32)
        mem = jnp.maximum(acc, 0.0)

    mem_out_ref[...] = mem
    mem3 = mem.reshape(BS, N, D)

    # ---- query attention hops ----
    q = q_ref[...]                                               # (BS, Q)
    for hop in range(HOPS):
        base = hop * HOP_ROWS
        # scorer([mem, q]) first Linear (bias-free) split: mem @ W1_mem + q @ W1_q
        qproj = jnp.dot(q, wts_ref[base + O_W1Q:base + O_W1Q + Q, 0:Q],
                        preferred_element_type=jnp.float32)      # (BS, Q)
        qb = jnp.broadcast_to(qproj.reshape(BS, 1, Q), (BS, N, Q)).reshape(BN, Q)
        h = jnp.tanh(jnp.dot(mem, wts_ref[base + O_W1M:base + O_W1M + D, 0:Q],
                             preferred_element_type=jnp.float32) + qb)
        h = jnp.tanh(jnp.dot(h, wts_ref[base + O_W2:base + O_W2 + Q, 0:A],
                             preferred_element_type=jnp.float32))
        logits = jnp.dot(h, wts_ref[base + O_W3:base + O_W3 + A, 0:1],
                         preferred_element_type=jnp.float32)     # (BN, 1)

        # masked softmax (memory_efficient=True semantics) + readout, batched
        # over all batch groups via axis=1 (sublane) reductions.
        # Note: if some kb_lens[b] == 0 this gives a uniform distribution for
        # that batch (the reference softmax is NaN there) -- degenerate case.
        lg = jnp.where(mask > 0.0, logits, NEG_INF).reshape(BS, N, 1)
        m = jnp.max(lg, axis=1, keepdims=True)
        e = jnp.exp(lg - m)
        dist = e * pl.reciprocal(jnp.sum(e, axis=1, keepdims=True), approx=True)
        q = q + jnp.sum(dist * mem3, axis=1)                     # (BS, Q)

    q_out_ref[...] = q


# ------------------------------- wrapper --------------------------------------
def graph_reasoning(query, kb_token, kb_type, kb_lens, graph, params):
    """query: (BS, Q); kb_token/kb_type: (BS, N, D); kb_lens: (BS,) int32;
    graph: (BS, R, N, N) dense 0/1. Returns (query_out (BS, Q), memory (BS, N, D))."""
    # ---- input packing (tiny, pure layout prep in XLA outside the kernel) ----
    # data buffer: rows [tok ; typ ; node-mask]  -> one DMA instead of three.
    mask = (jnp.arange(N)[None, :] < kb_lens[:, None]).astype(jnp.float32)  # (BS, N)
    data = jnp.concatenate(
        [kb_token.reshape(BN, D), kb_type.reshape(BN, D),
         jnp.broadcast_to(mask.reshape(BN, 1), (BN, D))], axis=0)            # (3*BN, D)

    # per-relation batch-block-diagonal adjacency, stacked over relations.
    g_bd = jnp.concatenate(
        [jax.scipy.linalg.block_diag(*[graph[b, r] for b in range(BS)])
         for r in range(R)], axis=0)                                          # (R*BN, BN)

    # packed weights: per hop [Wcat ; W1 ; W2 ; W3], every block at lane 0.
    wr_cat = jnp.concatenate(
        [params["W_r"][:, r] for r in range(R)] + [params["W_0"]], axis=-1)   # (HOPS, D, (R+1)*D)
    wts = jnp.zeros((HOPS * HOP_ROWS, (R + 1) * D), jnp.float32)
    for h in range(HOPS):
        b = h * HOP_ROWS
        wts = wts.at[b + O_WCAT:b + O_WCAT + D, :].set(wr_cat[h])
        wts = wts.at[b + O_W1M:b + O_W1M + D + Q, 0:Q].set(params["W1"][h])
        wts = wts.at[b + O_W2:b + O_W2 + Q, 0:A].set(params["W2"][h])
        wts = wts.at[b + O_W3:b + O_W3 + A, 0:1].set(params["W3"][h])

    def full(shape):
        nd = len(shape)
        return pl.BlockSpec(shape, lambda i, nd=nd: (0,) * nd)

    q_out, mem_out = pl.pallas_call(
        graph_reasoning_kernel,
        out_shape=(
            jax.ShapeDtypeStruct((BS, Q), jnp.float32),
            jax.ShapeDtypeStruct((BN, D), jnp.float32),
        ),
        grid=(1,),
        in_specs=[
            full((BS, Q)),
            full((3 * BN, D)),
            full((R * BN, BN)),
            full((HOPS * HOP_ROWS, (R + 1) * D)),
        ],
        out_specs=[
            full((BS, Q)),
            full((BN, D)),
        ],
        compiler_params=pltpu.CompilerParams(dimension_semantics=("arbitrary",)),
    )(query, data, g_bd, wts)
    return q_out, mem_out.reshape(BS, N, D)


# --------------------------- pure-JAX reference --------------------------------
def reference(query, kb_token, kb_type, kb_lens, graph, params):
    mem = kb_token + kb_type
    deg = jnp.maximum(graph.sum(-1, keepdims=True), 1.0)
    g = graph / deg
    for hop in range(HOPS):
        msg = jnp.einsum("brnm,bmd->brnd", g, mem)
        f1 = jnp.einsum("brnd,rdh->bnh", msg, params["W_r"][hop])
        f2 = mem @ params["W_0"][hop]
        mem = jax.nn.relu(f1 + f2)
    mask = jnp.arange(N)[None, :] < kb_lens[:, None]
    q = query
    for hop in range(HOPS):
        qe = jnp.broadcast_to(q[:, None, :], (BS, N, Q))
        h = jnp.tanh(jnp.concatenate([mem, qe], axis=-1) @ params["W1"][hop])
        h = jnp.tanh(h @ params["W2"][hop])
        logits = (h @ params["W3"][hop])[..., 0]
        logits = jnp.where(mask, logits, NEG_INF)
        dist = jax.nn.softmax(logits, axis=1)
        tvec = jnp.einsum("bn,bnd->bd", dist, mem)
        q = q + tvec
    return q, mem


# ------------------------------- params ---------------------------------------
def xavier(key, shape, fan_in, fan_out):
    bound = np.sqrt(6.0 / (fan_in + fan_out))
    return jax.random.uniform(key, shape, jnp.float32, -bound, bound)


def init_params(key):
    ks = jax.random.split(key, 5)
    return {
        # RelationalMessagePassing weights, stacked over hops
        "W_r": xavier(ks[0], (HOPS, R, D, D), D, D),
        "W_0": xavier(ks[1], (HOPS, D, D), D, D),
        # attn scorer: Linear(qsize+memsize -> qsize), (-> attn), (-> 1); bias-free.
        # W1 rows are [memory part ; query part], matching cat((memory, query), dim=2).
        "W1": xavier(ks[2], (HOPS, D + Q, Q), D + Q, Q),
        "W2": xavier(ks[3], (HOPS, Q, A), Q, A),
        "W3": xavier(ks[4], (HOPS, A, 1), A, 1),
    }


# --------------------------------- main ----------------------------------------
if __name__ == "__main__":
    key = jax.random.PRNGKey(0)
    k_q, k_tok, k_typ, k_g, k_p = jax.random.split(key, 5)

    query = jax.random.normal(k_q, (BS, Q), jnp.float32)
    kb_token = jax.random.normal(k_tok, (BS, N, D), jnp.float32)
    kb_type = jax.random.normal(k_typ, (BS, N, D), jnp.float32)
    kb_lens = jnp.array([N, N - 3], dtype=jnp.int32)
    # random sparse-ish 0/1 dense adjacency
    graph = (jax.random.uniform(k_g, (BS, R, N, N)) > 0.6).astype(jnp.float32)

    params = init_params(k_p)

    q_out, mem_out = graph_reasoning(query, kb_token, kb_type, kb_lens, graph, params)
    q_out = jax.block_until_ready(q_out)
    mem_out = jax.block_until_ready(mem_out)

    q_ref, mem_ref = reference(query, kb_token, kb_type, kb_lens, graph, params)
    np.testing.assert_allclose(np.asarray(q_out), np.asarray(q_ref), rtol=1e-2, atol=1e-2)
    np.testing.assert_allclose(np.asarray(mem_out), np.asarray(mem_ref), rtol=1e-2, atol=1e-2)

    print("KERNEL_OK")
</pallas_src>

<mosaic_0001>
module attributes {stable_mosaic.version = 11 : i64} {
  func.func @graph_reasoning_kernel(%arg0: i32, %arg1: memref<2x32xf32, #tpu.memory_space<vmem>>, %arg2: memref<48x32xf32, #tpu.memory_space<vmem>>, %arg3: memref<48x16xf32, #tpu.memory_space<vmem>>, %arg4: memref<288x128xf32, #tpu.memory_space<vmem>>, %arg5: memref<2x32xf32, #tpu.memory_space<vmem>>, %arg6: memref<16x32xf32, #tpu.memory_space<vmem>>) attributes {dimension_semantics = [#tpu.dimension_semantics<arbitrary>], iteration_bounds = array<i64: 1>, scalar_prefetch = 0 : i64, scratch_operands = 0 : i64, tpu.core_type = #tpu.core_type<tc>, window_params = [{pipeline_mode = #tpu.pipeline_mode<synchronous>, transform_indices = @transform_0, window_bounds = array<i64: 2, 32>}, {pipeline_mode = #tpu.pipeline_mode<synchronous>, transform_indices = @transform_1, window_bounds = array<i64: 48, 32>}, {pipeline_mode = #tpu.pipeline_mode<synchronous>, transform_indices = @transform_2, window_bounds = array<i64: 48, 16>}, {pipeline_mode = #tpu.pipeline_mode<synchronous>, transform_indices = @transform_3, window_bounds = array<i64: 288, 128>}, {pipeline_mode = #tpu.pipeline_mode<synchronous>, transform_indices = @transform_4, window_bounds = array<i64: 2, 32>}, {pipeline_mode = #tpu.pipeline_mode<synchronous>, transform_indices = @transform_5, window_bounds = array<i64: 16, 32>}]} {
    %c0 = arith.constant 0 : index
    %c0_0 = arith.constant 0 : index
    %0 = vector.load %arg2[%c0, %c0_0] : memref<48x32xf32, #tpu.memory_space<vmem>>, vector<16x32xf32>
    %c16 = arith.constant 16 : index
    %c0_1 = arith.constant 0 : index
    %1 = vector.load %arg2[%c16, %c0_1] : memref<48x32xf32, #tpu.memory_space<vmem>>, vector<16x32xf32>
    %2 = arith.addf %0, %1 : vector<16x32xf32>
    %c32 = arith.constant 32 : index
    %c0_2 = arith.constant 0 : index
    %3 = vector.load %arg2[%c32, %c0_2] : memref<48x32xf32, #tpu.memory_space<vmem>>, vector<16x1xf32>
    %c0_3 = arith.constant 0 : index
    %c0_4 = arith.constant 0 : index
    %4 = vector.load %arg3[%c0_3, %c0_4] : memref<48x16xf32, #tpu.memory_space<vmem>>, vector<48x16xf32>
    %cst = arith.constant dense<0.000000e+00> : vector<48xf32>
    %5 = vector.multi_reduction <add>, %4, %cst [1] : vector<48x16xf32> to vector<48xf32>
    %6 = vector.shape_cast %5 : vector<48xf32> to vector<48x1xf32>
    %cst_5 = arith.constant 1.000000e+00 : f32
    %7 = vector.broadcast %cst_5 : f32 to vector<48x1xf32>
    %8 = arith.maximumf %6, %7 : vector<48x1xf32>
    %9 = tpu.reciprocal %8 {approx = true} : vector<48x1xf32> -> vector<48x1xf32>
    %10 = vector.broadcast %9 : vector<48x1xf32> to vector<48x16xf32>
    %11 = arith.mulf %4, %10 : vector<48x16xf32>
    %c0_6 = arith.constant 0 : index
    %c0_7 = arith.constant 0 : index
    %12 = vector.load %arg4[%c0_6, %c0_7] : memref<288x128xf32, #tpu.memory_space<vmem>>, vector<32x128xf32>
    %cst_8 = arith.constant dense<0.000000e+00> : vector<16x128xf32>
    %13 = tpu.matmul %2, %12, %cst_8 {dimension_numbers = #tpu.dot_dimension_numbers<[1], [0], [0], [1], [0, 0, 1, 1], [], []>} : vector<16x32xf32>, vector<32x128xf32>, vector<16x128xf32> -> vector<16x128xf32>
    %14 = vector.extract_strided_slice %13 {offsets = [0, 96], sizes = [16, 32], strides = [1, 1]} : vector<16x128xf32> to vector<16x32xf32>
    %15 = vector.extract_strided_slice %11 {offsets = [0, 0], sizes = [16, 16], strides = [1, 1]} : vector<48x16xf32> to vector<16x16xf32>
    %16 = vector.extract_strided_slice %13 {offsets = [0, 0], sizes = [16, 32], strides = [1, 1]} : vector<16x128xf32> to vector<16x32xf32>
    %cst_9 = arith.constant dense<0.000000e+00> : vector<16x32xf32>
    %17 = tpu.matmul %15, %16, %cst_9 {dimension_numbers = #tpu.dot_dimension_numbers<[1], [0], [0], [1], [0, 0, 1, 1], [], []>} : vector<16x16xf32>, vector<16x32xf32>, vector<16x32xf32> -> vector<16x32xf32>
    %18 = arith.addf %14, %17 : vector<16x32xf32>
    %19 = vector.extract_strided_slice %11 {offsets = [16, 0], sizes = [16, 16], strides = [1, 1]} : vector<48x16xf32> to vector<16x16xf32>
    %20 = vector.extract_strided_slice %13 {offsets = [0, 32], sizes = [16, 32], strides = [1, 1]} : vector<16x128xf32> to vector<16x32xf32>
    %cst_10 = arith.constant dense<0.000000e+00> : vector<16x32xf32>
    %21 = tpu.matmul %19, %20, %cst_10 {dimension_numbers = #tpu.dot_dimension_numbers<[1], [0], [0], [1], [0, 0, 1, 1], [], []>} : vector<16x16xf32>, vector<16x32xf32>, vector<16x32xf32> -> vector<16x32xf32>
    %22 = arith.addf %18, %21 : vector<16x32xf32>
    %23 = vector.extract_strided_slice %11 {offsets = [32, 0], sizes = [16, 16], strides = [1, 1]} : vector<48x16xf32> to vector<16x16xf32>
    %24 = vector.extract_strided_slice %13 {offsets = [0, 64], sizes = [16, 32], strides = [1, 1]} : vector<16x128xf32> to vector<16x32xf32>
    %cst_11 = arith.constant dense<0.000000e+00> : vector<16x32xf32>
    %25 = tpu.matmul %23, %24, %cst_11 {dimension_numbers = #tpu.dot_dimension_numbers<[1], [0], [0], [1], [0, 0, 1, 1], [], []>} : vector<16x16xf32>, vector<16x32xf32>, vector<16x32xf32> -> vector<16x32xf32>
    %26 = arith.addf %22, %25 : vector<16x32xf32>
    %cst_12 = arith.constant 0.000000e+00 : f32
    %27 = vector.broadcast %cst_12 : f32 to vector<16x32xf32>
    %28 = arith.maximumf %26, %27 : vector<16x32xf32>
    %c144 = arith.constant 144 : index
    %c0_13 = arith.constant 0 : index
    %29 = vector.load %arg4[%c144, %c0_13] : memref<288x128xf32, #tpu.memory_space<vmem>>, vector<32x128xf32>
    %cst_14 = arith.constant dense<0.000000e+00> : vector<16x128xf32>
    %30 = tpu.matmul %28, %29, %cst_14 {dimension_numbers = #tpu.dot_dimension_numbers<[1], [0], [0], [1], [0, 0, 1, 1], [], []>} : vector<16x32xf32>, vector<32x128xf32>, vector<16x128xf32> -> vector<16x128xf32>
    %31 = vector.extract_strided_slice %30 {offsets = [0, 96], sizes = [16, 32], strides = [1, 1]} : vector<16x128xf32> to vector<16x32xf32>
    %32 = vector.extract_strided_slice %11 {offsets = [0, 0], sizes = [16, 16], strides = [1, 1]} : vector<48x16xf32> to vector<16x16xf32>
    %33 = vector.extract_strided_slice %30 {offsets = [0, 0], sizes = [16, 32], strides = [1, 1]} : vector<16x128xf32> to vector<16x32xf32>
    %cst_15 = arith.constant dense<0.000000e+00> : vector<16x32xf32>
    %34 = tpu.matmul %32, %33, %cst_15 {dimension_numbers = #tpu.dot_dimension_numbers<[1], [0], [0], [1], [0, 0, 1, 1], [], []>} : vector<16x16xf32>, vector<16x32xf32>, vector<16x32xf32> -> vector<16x32xf32>
    %35 = arith.addf %31, %34 : vector<16x32xf32>
    %36 = vector.extract_strided_slice %11 {offsets = [16, 0], sizes = [16, 16], strides = [1, 1]} : vector<48x16xf32> to vector<16x16xf32>
    %37 = vector.extract_strided_slice %30 {offsets = [0, 32], sizes = [16, 32], strides = [1, 1]} : vector<16x128xf32> to vector<16x32xf32>
    %cst_16 = arith.constant dense<0.000000e+00> : vector<16x32xf32>
    %38 = tpu.matmul %36, %37, %cst_16 {dimension_numbers = #tpu.dot_dimension_numbers<[1], [0], [0], [1], [0, 0, 1, 1], [], []>} : vector<16x16xf32>, vector<16x32xf32>, vector<16x32xf32> -> vector<16x32xf32>
    %39 = arith.addf %35, %38 : vector<16x32xf32>
    %40 = vector.extract_strided_slice %11 {offsets = [32, 0], sizes = [16, 16], strides = [1, 1]} : vector<48x16xf32> to vector<16x16xf32>
    %41 = vector.extract_strided_slice %30 {offsets = [0, 64], sizes = [16, 32], strides = [1, 1]} : vector<16x128xf32> to vector<16x32xf32>
    %cst_17 = arith.constant dense<0.000000e+00> : vector<16x32xf32>
    %42 = tpu.matmul %40, %41, %cst_17 {dimension_numbers = #tpu.dot_dimension_numbers<[1], [0], [0], [1], [0, 0, 1, 1], [], []>} : vector<16x16xf32>, vector<16x32xf32>, vector<16x32xf32> -> vector<16x32xf32>
    %43 = arith.addf %39, %42 : vector<16x32xf32>
    %cst_18 = arith.constant 0.000000e+00 : f32
    %44 = vector.broadcast %cst_18 : f32 to vector<16x32xf32>
    %45 = arith.maximumf %43, %44 : vector<16x32xf32>
    %c0_19 = arith.constant 0 : index
    %c0_20 = arith.constant 0 : index
    %46 = vector.load %arg6[%c0_19, %c0_20] : memref<16x32xf32, #tpu.memory_space<vmem>>, vector<16x32xf32>
    tpu.vector_store %arg6[%c0_19, %c0_20], %45 {strides = array<i32>} : memref<16x32xf32, #tpu.memory_space<vmem>>, vector<16x32xf32>,
    %47 = vector.shape_cast %45 : vector<16x32xf32> to vector<2x8x32xf32>
    %c0_21 = arith.constant 0 : index
    %c0_22 = arith.constant 0 : index
    %48 = vector.load %arg1[%c0_21, %c0_22] : memref<2x32xf32, #tpu.memory_space<vmem>>, vector<2x32xf32>
    %c64 = arith.constant 64 : index
    %c0_23 = arith.constant 0 : index
    %49 = vector.load %arg4[%c64, %c0_23] : memref<288x128xf32, #tpu.memory_space<vmem>>, vector<32x32xf32>
    %cst_24 = arith.constant dense<0.000000e+00> : vector<2x32xf32>
    %50 = tpu.matmul %48, %49, %cst_24 {dimension_numbers = #tpu.dot_dimension_numbers<[1], [0], [0], [1], [0, 0, 1, 1], [], []>} : vector<2x32xf32>, vector<32x32xf32>, vector<2x32xf32> -> vector<2x32xf32>
    %51 = vector.shape_cast %50 : vector<2x32xf32> to vector<2x1x32xf32>
    %52 = vector.shape_cast %51 : vector<2x1x32xf32> to vector<2x1x32xf32>
    %53 = vector.broadcast %52 : vector<2x1x32xf32> to vector<2x8x32xf32>
    %54 = vector.shape_cast %53 : vector<2x8x32xf32> to vector<16x32xf32>
    %c32_25 = arith.constant 32 : index
    %c0_26 = arith.constant 0 : index
    %55 = vector.load %arg4[%c32_25, %c0_26] : memref<288x128xf32, #tpu.memory_space<vmem>>, vector<32x32xf32>
    %cst_27 = arith.constant dense<0.000000e+00> : vector<16x32xf32>
    %56 = tpu.matmul %45, %55, %cst_27 {dimension_numbers = #tpu.dot_dimension_numbers<[1], [0], [0], [1], [0, 0, 1, 1], [], []>} : vector<16x32xf32>, vector<32x32xf32>, vector<16x32xf32> -> vector<16x32xf32>
    %57 = arith.addf %56, %54 : vector<16x32xf32>
    %58 = math.tanh %57 : vector<16x32xf32>
    %c96 = arith.constant 96 : index
    %c0_28 = arith.constant 0 : index
    %59 = vector.load %arg4[%c96, %c0_28] : memref<288x128xf32, #tpu.memory_space<vmem>>, vector<32x16xf32>
    %cst_29 = arith.constant dense<0.000000e+00> : vector<16x16xf32>
    %60 = tpu.matmul %58, %59, %cst_29 {dimension_numbers = #tpu.dot_dimension_numbers<[1], [0], [0], [1], [0, 0, 1, 1], [], []>} : vector<16x32xf32>, vector<32x16xf32>, vector<16x16xf32> -> vector<16x16xf32>
    %61 = math.tanh %60 : vector<16x16xf32>
    %c128 = arith.constant 128 : index
    %c0_30 = arith.constant 0 : index
    %62 = vector.load %arg4[%c128, %c0_30] : memref<288x128xf32, #tpu.memory_space<vmem>>, vector<16x1xf32>
    %cst_31 = arith.constant dense<0.000000e+00> : vector<16x1xf32>
    %63 = tpu.matmul %61, %62, %cst_31 {dimension_numbers = #tpu.dot_dimension_numbers<[1], [0], [0], [1], [0, 0, 1, 1], [], []>} : vector<16x16xf32>, vector<16x1xf32>, vector<16x1xf32> -> vector<16x1xf32>
    %cst_32 = arith.constant 0.000000e+00 : f32
    %64 = vector.broadcast %cst_32 : f32 to vector<16x1xf32>
    %65 = arith.cmpf ogt, %3, %64 : vector<16x1xf32>
    %cst_33 = arith.constant -3.40282347E+38 : f32
    %66 = vector.broadcast %cst_33 : f32 to vector<16x1xf32>
    %67 = arith.select %65, %63, %66 : vector<16x1xi1>, vector<16x1xf32>
    %68 = vector.shape_cast %67 : vector<16x1xf32> to vector<2x8x1xf32>
    %cst_34 = arith.constant dense<0xFF800000> : vector<2x1xf32>
    %69 = vector.multi_reduction <maximumf>, %68, %cst_34 [1] : vector<2x8x1xf32> to vector<2x1xf32>
    %70 = vector.shape_cast %69 : vector<2x1xf32> to vector<2x1x1xf32>
    %71 = vector.broadcast %70 : vector<2x1x1xf32> to vector<2x8x1xf32>
    %72 = arith.subf %68, %71 : vector<2x8x1xf32>
    %73 = math.exp %72 : vector<2x8x1xf32>
    %cst_35 = arith.constant dense<0.000000e+00> : vector<2x1xf32>
    %74 = vector.multi_reduction <add>, %73, %cst_35 [1] : vector<2x8x1xf32> to vector<2x1xf32>
    %75 = vector.shape_cast %74 : vector<2x1xf32> to vector<2x1x1xf32>
    %76 = tpu.reciprocal %75 {approx = true} : vector<2x1x1xf32> -> vector<2x1x1xf32>
    %77 = vector.broadcast %76 : vector<2x1x1xf32> to vector<2x8x1xf32>
    %78 = arith.mulf %73, %77 : vector<2x8x1xf32>
    %79 = vector.broadcast %78 : vector<2x8x1xf32> to vector<2x8x32xf32>
    %80 = arith.mulf %79, %47 : vector<2x8x32xf32>
    %cst_36 = arith.constant dense<0.000000e+00> : vector<2x32xf32>
    %81 = vector.multi_reduction <add>, %80, %cst_36 [1] : vector<2x8x32xf32> to vector<2x32xf32>
    %82 = arith.addf %48, %81 : vector<2x32xf32>
    %c208 = arith.constant 208 : index
    %c0_37 = arith.constant 0 : index
    %83 = vector.load %arg4[%c208, %c0_37] : memref<288x128xf32, #tpu.memory_space<vmem>>, vector<32x32xf32>
    %cst_38 = arith.constant dense<0.000000e+00> : vector<2x32xf32>
    %84 = tpu.matmul %82, %83, %cst_38 {dimension_numbers = #tpu.dot_dimension_numbers<[1], [0], [0], [1], [0, 0, 1, 1], [], []>} : vector<2x32xf32>, vector<32x32xf32>, vector<2x32xf32> -> vector<2x32xf32>
    %85 = vector.shape_cast %84 : vector<2x32xf32> to vector<2x1x32xf32>
    %86 = vector.shape_cast %85 : vector<2x1x32xf32> to vector<2x1x32xf32>
    %87 = vector.broadcast %86 : vector<2x1x32xf32> to vector<2x8x32xf32>
    %88 = vector.shape_cast %87 : vector<2x8x32xf32> to vector<16x32xf32>
    %c176 = arith.constant 176 : index
    %c0_39 = arith.constant 0 : index
    %89 = vector.load %arg4[%c176, %c0_39] : memref<288x128xf32, #tpu.memory_space<vmem>>, vector<32x32xf32>
    %cst_40 = arith.constant dense<0.000000e+00> : vector<16x32xf32>
    %90 = tpu.matmul %45, %89, %cst_40 {dimension_numbers = #tpu.dot_dimension_numbers<[1], [0], [0], [1], [0, 0, 1, 1], [], []>} : vector<16x32xf32>, vector<32x32xf32>, vector<16x32xf32> -> vector<16x32xf32>
    %91 = arith.addf %90, %88 : vector<16x32xf32>
    %92 = math.tanh %91 : vector<16x32xf32>
    %c240 = arith.constant 240 : index
    %c0_41 = arith.constant 0 : index
    %93 = vector.load %arg4[%c240, %c0_41] : memref<288x128xf32, #tpu.memory_space<vmem>>, vector<32x16xf32>
    %cst_42 = arith.constant dense<0.000000e+00> : vector<16x16xf32>
    %94 = tpu.matmul %92, %93, %cst_42 {dimension_numbers = #tpu.dot_dimension_numbers<[1], [0], [0], [1], [0, 0, 1, 1], [], []>} : vector<16x32xf32>, vector<32x16xf32>, vector<16x16xf32> -> vector<16x16xf32>
    %95 = math.tanh %94 : vector<16x16xf32>
    %c272 = arith.constant 272 : index
    %c0_43 = arith.constant 0 : index
    %96 = vector.load %arg4[%c272, %c0_43] : memref<288x128xf32, #tpu.memory_space<vmem>>, vector<16x1xf32>
    %cst_44 = arith.constant dense<0.000000e+00> : vector<16x1xf32>
    %97 = tpu.matmul %95, %96, %cst_44 {dimension_numbers = #tpu.dot_dimension_numbers<[1], [0], [0], [1], [0, 0, 1, 1], [], []>} : vector<16x16xf32>, vector<16x1xf32>, vector<16x1xf32> -> vector<16x1xf32>
    %cst_45 = arith.constant 0.000000e+00 : f32
    %98 = vector.broadcast %cst_45 : f32 to vector<16x1xf32>
    %99 = arith.cmpf ogt, %3, %98 : vector<16x1xf32>
    %cst_46 = arith.constant -3.40282347E+38 : f32
    %100 = vector.broadcast %cst_46 : f32 to vector<16x1xf32>
    %101 = arith.select %99, %97, %100 : vector<16x1xi1>, vector<16x1xf32>
    %102 = vector.shape_cast %101 : vector<16x1xf32> to vector<2x8x1xf32>
    %cst_47 = arith.constant dense<0xFF800000> : vector<2x1xf32>
    %103 = vector.multi_reduction <maximumf>, %102, %cst_47 [1] : vector<2x8x1xf32> to vector<2x1xf32>
    %104 = vector.shape_cast %103 : vector<2x1xf32> to vector<2x1x1xf32>
    %105 = vector.broadcast %104 : vector<2x1x1xf32> to vector<2x8x1xf32>
    %106 = arith.subf %102, %105 : vector<2x8x1xf32>
    %107 = math.exp %106 : vector<2x8x1xf32>
    %cst_48 = arith.constant dense<0.000000e+00> : vector<2x1xf32>
    %108 = vector.multi_reduction <add>, %107, %cst_48 [1] : vector<2x8x1xf32> to vector<2x1xf32>
    %109 = vector.shape_cast %108 : vector<2x1xf32> to vector<2x1x1xf32>
    %110 = tpu.reciprocal %109 {approx = true} : vector<2x1x1xf32> -> vector<2x1x1xf32>
    %111 = vector.broadcast %110 : vector<2x1x1xf32> to vector<2x8x1xf32>
    %112 = arith.mulf %107, %111 : vector<2x8x1xf32>
    %113 = vector.broadcast %112 : vector<2x8x1xf32> to vector<2x8x32xf32>
    %114 = arith.mulf %113, %47 : vector<2x8x32xf32>
    %cst_49 = arith.constant dense<0.000000e+00> : vector<2x32xf32>
    %115 = vector.multi_reduction <add>, %114, %cst_49 [1] : vector<2x8x32xf32> to vector<2x32xf32>
    %116 = arith.addf %82, %115 : vector<2x32xf32>
    %c0_50 = arith.constant 0 : index
    %c0_51 = arith.constant 0 : index
    %117 = vector.load %arg5[%c0_50, %c0_51] : memref<2x32xf32, #tpu.memory_space<vmem>>, vector<2x32xf32>
    tpu.vector_store %arg5[%c0_50, %c0_51], %116 {strides = array<i32>} : memref<2x32xf32, #tpu.memory_space<vmem>>, vector<2x32xf32>,
    return
  }
  func.func @transform_0(%arg0: i32) -> (i32, i32) {
    %c0_i32 = arith.constant 0 : i32
    %c0_i32_0 = arith.constant 0 : i32
    %c0_i32_1 = arith.constant 0 : i32
    return %c0_i32, %c0_i32_0 : i32, i32
  }
  func.func @transform_1(%arg0: i32) -> (i32, i32) {
    %c0_i32 = arith.constant 0 : i32
    %c0_i32_0 = arith.constant 0 : i32
    %c0_i32_1 = arith.constant 0 : i32
    return %c0_i32, %c0_i32_0 : i32, i32
  }
  func.func @transform_2(%arg0: i32) -> (i32, i32) {
    %c0_i32 = arith.constant 0 : i32
    %c0_i32_0 = arith.constant 0 : i32
    %c0_i32_1 = arith.constant 0 : i32
    return %c0_i32, %c0_i32_0 : i32, i32
  }
  func.func @transform_3(%arg0: i32) -> (i32, i32) {
    %c0_i32 = arith.constant 0 : i32
    %c0_i32_0 = arith.constant 0 : i32
    %c0_i32_1 = arith.constant 0 : i32
    return %c0_i32, %c0_i32_0 : i32, i32
  }
  func.func @transform_4(%arg0: i32) -> (i32, i32) {
    %c0_i32 = arith.constant 0 : i32
    %c0_i32_0 = arith.constant 0 : i32
    %c0_i32_1 = arith.constant 0 : i32
    return %c0_i32, %c0_i32_0 : i32, i32
  }
  func.func @transform_5(%arg0: i32) -> (i32, i32) {
    %c0_i32 = arith.constant 0 : i32
    %c0_i32_0 = arith.constant 0 : i32
    %c0_i32_1 = arith.constant 0 : i32
    return %c0_i32, %c0_i32_0 : i32, i32
  }
}

</mosaic_0001>

<llo_original>
// kernel: tpu_custom_call.1
$region0: #{tpu_custom_call.1}
  #allocation0 [shape = 'u32[]', space=smem, size = 0x4, offset = 0x4, fixed_abs, tag = 'smem constant byte address 0x4 - core index']
  #allocation1 [shape = 'u32[144,128]{1,0:T(1,128)}', space=vmem, size = 0x12000, scoped, tag = 'internal scratch']
  %s0 = inlined_call_operand.vmem [shape: f32[2,32], index: 0, kind: input, shape index: {}]
  %s1 = inlined_call_operand.vmem [shape: f32[48,32], index: 1, kind: input, shape index: {}]
  %s2 = inlined_call_operand.vmem [shape: f32[48,16], index: 2, kind: input, shape index: {}]
  %s3 = inlined_call_operand.hbm [shape: f32[288,128], index: 3, kind: input, shape index: {}]
  %s4 = inlined_call_operand.hbm [shape: f32[2,32], index: 4, kind: output, shape index: {0}]
  %s5 = inlined_call_operand.hbm [shape: f32[16,32], index: 5, kind: output, shape index: {1}]
  %6 = xla_tuple %s4, %s5
  %s7 = sld [smem:[#allocation0]]
  $region38: #{tpu_custom_call.1} parent=0
    _
  %s9 = ssub.s32 1, %s7
  %s10 = scalar_select 0, %s9, %s7
  $region1: #{tpu_custom_call.1} parent=0
    #allocation2 [shape = 'u8[147456]{0}', space=vmem, size = 0x24000, scoped, tag = 'input window, operand 3, single buffered']
    #allocation3 [shape = 's32[1]{0}', space=sflag, size = 0x4, scoped, tag = 'scoped memory for tpu_custom_call.1']
    #allocation4 [shape = 's32[1]{0}', space=sflag, size = 0x4, scoped, tag = 'scoped memory for tpu_custom_call.1']
    #allocation5 [shape = 'u8[1024]{0}', space=vmem, size = 0x400, scoped, tag = 'output window, operand 0, single buffered']
    #allocation6 [shape = 'u8[8192]{0}', space=vmem, size = 0x2000, scoped, tag = 'output window, operand 1, single buffered']
    #allocation7 [shape = 's32[1]{0}', space=sflag, size = 0x4, scoped, tag = 'scoped memory for tpu_custom_call.1']
    %11 = vsyncpa [#allocation3], 0
    %12 = vsyncpa [#allocation4], 0
    %13 = vsyncpa [#allocation7], 0
    // Predicated region
    $region2: #{tpu_custom_call.1} parent=1 // pred_check
      _
    $region3: #{tpu_custom_call.1} parent=1 // pred_check_branch
      %15 = sbr.rel (0) target = $region5
    $region4: #{tpu_custom_call.1} parent=1 // pred_region
      _
    $region5: #{tpu_custom_call.1} parent=1 // pred_fallthru
      _
    // Predicated region
    $region6: #{tpu_custom_call.1} parent=1 // pred_check
      _
    $region7: #{tpu_custom_call.1} parent=1 // pred_check_branch
      %17 = sbr.rel (0) target = $region9
    $region8: #{tpu_custom_call.1} parent=1 // pred_region
      _
    $region9: #{tpu_custom_call.1} parent=1 // pred_fallthru
      _
    // Predicated region
    $region10: #{tpu_custom_call.1} parent=1 // pred_check
      _
    $region11: #{tpu_custom_call.1} parent=1 // pred_check_branch
      %19 = sbr.rel (0) target = $region13
    $region12: #{tpu_custom_call.1} parent=1 // pred_region
      _
    $region13: #{tpu_custom_call.1} parent=1 // pred_fallthru
      _
    // Predicated region
    $region14: #{tpu_custom_call.1} parent=1 // pred_check
      _
    $region15: #{tpu_custom_call.1} parent=1 // pred_check_branch
      %21 = sbr.rel (0) target = $region17
    $region16: #{tpu_custom_call.1} parent=1 // pred_region
      %s23 = ssub.s32 4608, 4608
      %24 = vsyncadd [#allocation3], %s23
      %s25 = sshll.u32 [#allocation2], 4
      %s26 = int_to_ptr.vmem [resolvable:$true] %s25
      %31 = dma.hbm_to_vmem [thread:$0]  %s3, 4608, %s26, [#allocation3], 128, 128, 8
    $region17: #{tpu_custom_call.1} parent=1 // pred_fallthru
      _
    // Predicated region
    $region18: #{tpu_custom_call.1} parent=1 // pred_check
      _
    $region19: #{tpu_custom_call.1} parent=1 // pred_check_branch
      %33 = sbr.rel (0) target = $region21
    $region20: #{tpu_custom_call.1} parent=1 // pred_region
      %34 = dma.done [#allocation3], 4608
    $region21: #{tpu_custom_call.1} parent=1 // pred_fallthru
      _
    %v35 = vld [vmem:[%s1] sm:$0xff]
    %v36 = vld [vmem:[%s1 + $0x8] sm:$0xff]
    %v37 = vld [vmem:[%s1 + $0x10] sm:$0xff]
    %v38 = vld [vmem:[%s1 + $0x18] sm:$0xff]
    %v39 = vadd.f32 %v35, %v37
    %v40 = vadd.f32 %v36, %v38
    %v41 = vld [vmem:[%s1 + $0x20] sm:$0xff]
    %v42 = vld [vmem:[%s1 + $0x28] sm:$0xff]
    %v43 = vld [vmem:[%s2] sm:$0xff]
    %v44 = vld [vmem:[%s2 + $0x8] sm:$0xff]
    %v45 = vld [vmem:[%s2 + $0x10] sm:$0xff]
    %v46 = vld [vmem:[%s2 + $0x18] sm:$0xff]
    %v47 = vld [vmem:[%s2 + $0x20] sm:$0xff]
    %v48 = vld [vmem:[%s2 + $0x28] sm:$0xff]
    %vm49 = vcmask 130048
    %v50 = vsel %vm49, %v43, 0.0
    %51 = vadd.xlane.f32.xlu0 %v50
    %v52 = vpop.xlane.xlu0 %51
    %v53 = vsel %vm49, %v44, 0.0
    %54 = vadd.xlane.f32.xlu0 %v53
    %v55 = vpop.xlane.xlu0 %54
    %v56 = vsel %vm49, %v45, 0.0
    %57 = vadd.xlane.f32.xlu0 %v56
    %v58 = vpop.xlane.xlu0 %57
    %v59 = vsel %vm49, %v46, 0.0
    %60 = vadd.xlane.f32.xlu0 %v59
    %v61 = vpop.xlane.xlu0 %60
    %v62 = vsel %vm49, %v47, 0.0
    %63 = vadd.xlane.f32.xlu0 %v62
    %v64 = vpop.xlane.xlu0 %63
    %v65 = vsel %vm49, %v48, 0.0
    %66 = vadd.xlane.f32.xlu0 %v65
    %v67 = vpop.xlane.xlu0 %66
    %v68 = vmax.f32 %v52, 1.0
    %v69 = vmax.f32 %v55, 1.0
    %v70 = vmax.f32 %v58, 1.0
    %v71 = vmax.f32 %v61, 1.0
    %v72 = vmax.f32 %v64, 1.0
    %v73 = vmax.f32 %v67, 1.0
    %v74 = vrcp.pop %v68
    %v75 = vrcp.pop %v69
    %v76 = vrcp.pop %v70
    %v77 = vrcp.pop %v71
    %v78 = vrcp.pop %v72
    %v79 = vrcp.pop %v73
    %v80 = vmul.f32 %v43, %v74
    %v81 = vmul.f32 %v44, %v75
    %v82 = vmul.f32 %v45, %v76
    %v83 = vmul.f32 %v46, %v77
    %v84 = vmul.f32 %v47, %v78
    %v85 = vmul.f32 %v48, %v79
    %v86 = vld [vmem:[#allocation2] sm:$0xff]
    %v87 = vld [vmem:[#allocation2 + $0x8] sm:$0xff]
    %v88 = vld [vmem:[#allocation2 + $0x10] sm:$0xff]
    %v89 = vld [vmem:[#allocation2 + $0x18] sm:$0xff]
    %vm90 = vcmask 261120
    %v92 = vsel %vm90, %v39, 0
    %v95 = vsel %vm90, %v40, 0
    %97 = vmatprep.subr.mxu0 0.0
    %98 = vmatpush1.msra.mxu0 0.0
    %99 = vmatprep.subr.mxu0 0.0
    %100 = vmatpush1.msra.mxu0 0.0
    %101 = vmatprep.subr.mxu0 0.0
    %102 = vmatpush1.msra.mxu0 0.0
    %103 = vmatprep.subr.mxu0 0.0
    %104 = vmatpush1.msra.mxu0 0.0
    %105 = vmatprep.subr.mxu0 0.0
    %106 = vmatpush1.msra.mxu0 0.0
    %107 = vmatprep.subr.mxu0 0.0
    %108 = vmatpush1.msra.mxu0 0.0
    %109 = vmatprep.subr.mxu0 0.0
    %110 = vmatpush1.msra.mxu0 0.0
    %111 = vmatprep.subr.mxu0 0.0
    %112 = vmatpush1.msra.mxu0 0.0
    %113 = vmatprep.subr.mxu0 0.0
    %114 = vmatpush1.msra.mxu0 0.0
    %115 = vmatprep.subr.mxu0 0.0
    %116 = vmatpush1.msra.mxu0 0.0
    %117 = vmatprep.subr.mxu0 0.0
    %118 = vmatpush1.msra.mxu0 0.0
    %119 = vmatprep.subr.mxu0 0.0
    %120 = vmatpush1.msra.mxu0 0.0
    %121 = vmatprep.subr.mxu0 0.0
    %122 = vmatpush1.msra.mxu0 %v89
    %123 = vmatprep.subr.mxu0 0.0
    %124 = vmatpush1.msra.mxu0 %v88
    %125 = vmatprep.subr.mxu0 0.0
    %126 = vmatpush1.msra.mxu0 %v87
    %127 = vmatprep.subr.mxu0 0.0
    %128 = vmatpush1.msra.mxu0 %v86
    %129 = vmatprep.subr.mxu0 0.0
    %130 = vmatpush2.msra.mxu0 0.0
    %131 = vmatprep.subr.mxu0 0.0
    %132 = vmatpush2.msra.mxu0 0.0
    %133 = vmatprep.subr.mxu0 0.0
    %134 = vmatpush2.msra.mxu0 0.0
    %135 = vmatprep.subr.mxu0 0.0
    %136 = vmatpush2.msra.mxu0 0.0
    %137 = vmatprep.subr.mxu0 0.0
    %138 = vmatpush2.msra.mxu0 0.0
    %139 = vmatprep.subr.mxu0 0.0
    %140 = vmatpush2.msra.mxu0 0.0
    %141 = vmatprep.subr.mxu0 0.0
    %142 = vmatpush2.msra.mxu0 0.0
    %143 = vmatprep.subr.mxu0 0.0
    %144 = vmatpush2.msra.mxu0 0.0
    %145 = vmatprep.subr.mxu0 0.0
    %146 = vmatpush2.msra.mxu0 0.0
    %147 = vmatprep.subr.mxu0 0.0
    %148 = vmatpush2.msra.mxu0 0.0
    %149 = vmatprep.subr.mxu0 0.0
    %150 = vmatpush2.msra.mxu0 0.0
    %151 = vmatprep.subr.mxu0 0.0
    %152 = vmatpush2.msra.mxu0 0.0
    %153 = vmatprep.subr.mxu0 0.0
    %154 = vmatpush2.msra.mxu0 0.0
    %155 = vmatprep.subr.mxu0 0.0
    %156 = vmatpush2.msra.mxu0 0.0
    %157 = vmatprep.subr.mxu0 0.0
    %158 = vmatpush2.msra.mxu0 0.0
    %159 = vmatprep.subr.mxu0 0.0
    %160 = vmatpush2.msra.mxu0 0.0
    %161 = vmatprep.mubr.f32.mxu0 0.0
    %162 = vmatmul.mubr.f32.gmra.mxu0 %v92
    %v163 = vpop.f32.mrf.mxu0
    %v164 = vadd.f32 0.0, %v163
    %v165 = vpop.f32.mrf.mxu0
    %166 = vmatprep.mubr.f32.mxu0 0.0
    %167 = vmatmul.mubr.f32.gmra.mxu0 %v95
    %v168 = vpop.f32.mrf.mxu0
    %v169 = vadd.f32 0.0, %v168
    %v170 = vpop.f32.mrf.mxu0
    %171 = vdwg.mxu0
    %v173 = vsel %vm49, %v80, 0
    %v176 = vsel %vm49, %v81, 0
    %178 = vmatprep.subr.mxu0 0.0
    %179 = vmatpush1.msra.mxu0 0.0
    %180 = vmatprep.subr.mxu0 0.0
    %181 = vmatpush1.msra.mxu0 0.0
    %182 = vmatprep.subr.mxu0 0.0
    %183 = vmatpush1.msra.mxu0 0.0
    %184 = vmatprep.subr.mxu0 0.0
    %185 = vmatpush1.msra.mxu0 0.0
    %186 = vmatprep.subr.mxu0 0.0
    %187 = vmatpush1.msra.mxu0 0.0
    %188 = vmatprep.subr.mxu0 0.0
    %189 = vmatpush1.msra.mxu0 0.0
    %190 = vmatprep.subr.mxu0 0.0
    %191 = vmatpush1.msra.mxu0 0.0
    %192 = vmatprep.subr.mxu0 0.0
    %193 = vmatpush1.msra.mxu0 0.0
    %194 = vmatprep.subr.mxu0 0.0
    %195 = vmatpush1.msra.mxu0 0.0
    %196 = vmatprep.subr.mxu0 0.0
    %197 = vmatpush1.msra.mxu0 0.0
    %198 = vmatprep.subr.mxu0 0.0
    %199 = vmatpush1.msra.mxu0 0.0
    %200 = vmatprep.subr.mxu0 0.0
    %201 = vmatpush1.msra.mxu0 0.0
    %202 = vmatprep.subr.mxu0 0.0
    %203 = vmatpush1.msra.mxu0 0.0
    %204 = vmatprep.subr.mxu0 0.0
    %205 = vmatpush1.msra.mxu0 0.0
    %206 = vmatprep.subr.mxu0 0.0
    %207 = vmatpush1.msra.mxu0 %v169
    %208 = vmatprep.subr.mxu0 0.0
    %209 = vmatpush1.msra.mxu0 %v164
    %210 = vmatprep.subr.mxu0 0.0
    %211 = vmatpush2.msra.mxu0 0.0
    %212 = vmatprep.subr.mxu0 0.0
    %213 = vmatpush2.msra.mxu0 0.0
    %214 = vmatprep.subr.mxu0 0.0
    %215 = vmatpush2.msra.mxu0 0.0
    %216 = vmatprep.subr.mxu0 0.0
    %217 = vmatpush2.msra.mxu0 0.0
    %218 = vmatprep.subr.mxu0 0.0
    %219 = vmatpush2.msra.mxu0 0.0
    %220 = vmatprep.subr.mxu0 0.0
    %221 = vmatpush2.msra.mxu0 0.0
    %222 = vmatprep.subr.mxu0 0.0
    %223 = vmatpush2.msra.mxu0 0.0
    %224 = vmatprep.subr.mxu0 0.0
    %225 = vmatpush2.msra.mxu0 0.0
    %226 = vmatprep.subr.mxu0 0.0
    %227 = vmatpush2.msra.mxu0 0.0
    %228 = vmatprep.subr.mxu0 0.0
    %229 = vmatpush2.msra.mxu0 0.0
    %230 = vmatprep.subr.mxu0 0.0
    %231 = vmatpush2.msra.mxu0 0.0
    %232 = vmatprep.subr.mxu0 0.0
    %233 = vmatpush2.msra.mxu0 0.0
    %234 = vmatprep.subr.mxu0 0.0
    %235 = vmatpush2.msra.mxu0 0.0
    %236 = vmatprep.subr.mxu0 0.0
    %237 = vmatpush2.msra.mxu0 0.0
    %238 = vmatprep.subr.mxu0 0.0
    %239 = vmatpush2.msra.mxu0 0.0
    %240 = vmatprep.subr.mxu0 0.0
    %241 = vmatpush2.msra.mxu0 0.0
    %242 = vmatprep.mubr.f32.mxu0 0.0
    %243 = vmatmul.mubr.f32.gmra.mxu0 %v173
    %v244 = vpop.f32.mrf.mxu0
    %v245 = vadd.f32 0.0, %v244
    %v246 = vpop.f32.mrf.mxu0
    %247 = vmatprep.mubr.f32.mxu0 0.0
    %248 = vmatmul.mubr.f32.gmra.mxu0 %v176
    %v249 = vpop.f32.mrf.mxu0
    %v250 = vadd.f32 0.0, %v249
    %v251 = vpop.f32.mrf.mxu0
    %252 = vdwg.mxu0
    %255 = vrot.lane.b32.xlu0 %v245, 96
    %v256 = vpop.permute.xlu0 %255
    %257 = vrot.lane.b32.xlu0 %v250, 96
    %v258 = vpop.permute.xlu0 %257
    %v261 = vadd.f32 %v164, %v256
    %v262 = vadd.f32 %v169, %v258
    %265 = vrot.lane.b32.xlu0 %v164, 96
    %v266 = vpop.permute.xlu0 %265
    %267 = vrot.lane.b32.xlu0 %v169, 96
    %v268 = vpop.permute.xlu0 %267
    %v272 = vsel %vm49, %v82, 0
    %v275 = vsel %vm49, %v83, 0
    %277 = vmatprep.subr.mxu0 0.0
    %278 = vmatpush1.msra.mxu0 0.0
    %279 = vmatprep.subr.mxu0 0.0
    %280 = vmatpush1.msra.mxu0 0.0
    %281 = vmatprep.subr.mxu0 0.0
    %282 = vmatpush1.msra.mxu0 0.0
    %283 = vmatprep.subr.mxu0 0.0
    %284 = vmatpush1.msra.mxu0 0.0
    %285 = vmatprep.subr.mxu0 0.0
    %286 = vmatpush1.msra.mxu0 0.0
    %287 = vmatprep.subr.mxu0 0.0
    %288 = vmatpush1.msra.mxu0 0.0
    %289 = vmatprep.subr.mxu0 0.0
    %290 = vmatpush1.msra.mxu0 0.0
    %291 = vmatprep.subr.mxu0 0.0
    %292 = vmatpush1.msra.mxu0 0.0
    %293 = vmatprep.subr.mxu0 0.0
    %294 = vmatpush1.msra.mxu0 0.0
    %295 = vmatprep.subr.mxu0 0.0
    %296 = vmatpush1.msra.mxu0 0.0
    %297 = vmatprep.subr.mxu0 0.0
    %298 = vmatpush1.msra.mxu0 0.0
    %299 = vmatprep.subr.mxu0 0.0
    %300 = vmatpush1.msra.mxu0 0.0
    %301 = vmatprep.subr.mxu0 0.0
    %302 = vmatpush1.msra.mxu0 0.0
    %303 = vmatprep.subr.mxu0 0.0
    %304 = vmatpush1.msra.mxu0 0.0
    %305 = vmatprep.subr.mxu0 0.0
    %306 = vmatpush1.msra.mxu0 %v268
    %307 = vmatprep.subr.mxu0 0.0
    %308 = vmatpush1.msra.mxu0 %v266
    %309 = vmatprep.subr.mxu0 0.0
    %310 = vmatpush2.msra.mxu0 0.0
    %311 = vmatprep.subr.mxu0 0.0
    %312 = vmatpush2.msra.mxu0 0.0
    %313 = vmatprep.subr.mxu0 0.0
    %314 = vmatpush2.msra.mxu0 0.0
    %315 = vmatprep.subr.mxu0 0.0
    %316 = vmatpush2.msra.mxu0 0.0
    %317 = vmatprep.subr.mxu0 0.0
    %318 = vmatpush2.msra.mxu0 0.0
    %319 = vmatprep.subr.mxu0 0.0
    %320 = vmatpush2.msra.mxu0 0.0
    %321 = vmatprep.subr.mxu0 0.0
    %322 = vmatpush2.msra.mxu0 0.0
    %323 = vmatprep.subr.mxu0 0.0
    %324 = vmatpush2.msra.mxu0 0.0
    %325 = vmatprep.subr.mxu0 0.0
    %326 = vmatpush2.msra.mxu0 0.0
    %327 = vmatprep.subr.mxu0 0.0
    %328 = vmatpush2.msra.mxu0 0.0
    %329 = vmatprep.subr.mxu0 0.0
    %330 = vmatpush2.msra.mxu0 0.0
    %331 = vmatprep.subr.mxu0 0.0
    %332 = vmatpush2.msra.mxu0 0.0
    %333 = vmatprep.subr.mxu0 0.0
    %334 = vmatpush2.msra.mxu0 0.0
    %335 = vmatprep.subr.mxu0 0.0
    %336 = vmatpush2.msra.mxu0 0.0
    %337 = vmatprep.subr.mxu0 0.0
    %338 = vmatpush2.msra.mxu0 0.0
    %339 = vmatprep.subr.mxu0 0.0
    %340 = vmatpush2.msra.mxu0 0.0
    %341 = vmatprep.mubr.f32.mxu0 0.0
    %342 = vmatmul.mubr.f32.gmra.mxu0 %v272
    %v343 = vpop.f32.mrf.mxu0
    %v344 = vadd.f32 0.0, %v343
    %v345 = vpop.f32.mrf.mxu0
    %346 = vmatprep.mubr.f32.mxu0 0.0
    %347 = vmatmul.mubr.f32.gmra.mxu0 %v275
    %v348 = vpop.f32.mrf.mxu0
    %v349 = vadd.f32 0.0, %v348
    %v350 = vpop.f32.mrf.mxu0
    %351 = vdwg.mxu0
    %354 = vrot.lane.b32.xlu0 %v344, 96
    %v355 = vpop.permute.xlu0 %354
    %356 = vrot.lane.b32.xlu0 %v349, 96
    %v357 = vpop.permute.xlu0 %356
    %v360 = vadd.f32 %v261, %v355
    %v361 = vadd.f32 %v262, %v357
    %362 = vrot.lane.b32.xlu0 %v164, 64
    %v363 = vpop.permute.xlu0 %362
    %364 = vrot.lane.b32.xlu0 %v169, 64
    %v365 = vpop.permute.xlu0 %364
    %v369 = vsel %vm49, %v84, 0
    %v372 = vsel %vm49, %v85, 0
    %374 = vmatprep.subr.mxu0 0.0
    %375 = vmatpush1.msra.mxu0 0.0
    %376 = vmatprep.subr.mxu0 0.0
    %377 = vmatpush1.msra.mxu0 0.0
    %378 = vmatprep.subr.mxu0 0.0
    %379 = vmatpush1.msra.mxu0 0.0
    %380 = vmatprep.subr.mxu0 0.0
    %381 = vmatpush1.msra.mxu0 0.0
    %382 = vmatprep.subr.mxu0 0.0
    %383 = vmatpush1.msra.mxu0 0.0
    %384 = vmatprep.subr.mxu0 0.0
    %385 = vmatpush1.msra.mxu0 0.0
    %386 = vmatprep.subr.mxu0 0.0
    %387 = vmatpush1.msra.mxu0 0.0
    %388 = vmatprep.subr.mxu0 0.0
    %389 = vmatpush1.msra.mxu0 0.0
    %390 = vmatprep.subr.mxu0 0.0
    %391 = vmatpush1.msra.mxu0 0.0
    %392 = vmatprep.subr.mxu0 0.0
    %393 = vmatpush1.msra.mxu0 0.0
    %394 = vmatprep.subr.mxu0 0.0
    %395 = vmatpush1.msra.mxu0 0.0
    %396 = vmatprep.subr.mxu0 0.0
    %397 = vmatpush1.msra.mxu0 0.0
    %398 = vmatprep.subr.mxu0 0.0
    %399 = vmatpush1.msra.mxu0 0.0
    %400 = vmatprep.subr.mxu0 0.0
    %401 = vmatpush1.msra.mxu0 0.0
    %402 = vmatprep.subr.mxu0 0.0
    %403 = vmatpush1.msra.mxu0 %v365
    %404 = vmatprep.subr.mxu0 0.0
    %405 = vmatpush1.msra.mxu0 %v363
    %406 = vmatprep.subr.mxu0 0.0
    %407 = vmatpush2.msra.mxu0 0.0
    %408 = vmatprep.subr.mxu0 0.0
    %409 = vmatpush2.msra.mxu0 0.0
    %410 = vmatprep.subr.mxu0 0.0
    %411 = vmatpush2.msra.mxu0 0.0
    %412 = vmatprep.subr.mxu0 0.0
    %413 = vmatpush2.msra.mxu0 0.0
    %414 = vmatprep.subr.mxu0 0.0
    %415 = vmatpush2.msra.mxu0 0.0
    %416 = vmatprep.subr.mxu0 0.0
    %417 = vmatpush2.msra.mxu0 0.0
    %418 = vmatprep.subr.mxu0 0.0
    %419 = vmatpush2.msra.mxu0 0.0
    %420 = vmatprep.subr.mxu0 0.0
    %421 = vmatpush2.msra.mxu0 0.0
    %422 = vmatprep.subr.mxu0 0.0
    %423 = vmatpush2.msra.mxu0 0.0
    %424 = vmatprep.subr.mxu0 0.0
    %425 = vmatpush2.msra.mxu0 0.0
    %426 = vmatprep.subr.mxu0 0.0
    %427 = vmatpush2.msra.mxu0 0.0
    %428 = vmatprep.subr.mxu0 0.0
    %429 = vmatpush2.msra.mxu0 0.0
    %430 = vmatprep.subr.mxu0 0.0
    %431 = vmatpush2.msra.mxu0 0.0
    %432 = vmatprep.subr.mxu0 0.0
    %433 = vmatpush2.msra.mxu0 0.0
    %434 = vmatprep.subr.mxu0 0.0
    %435 = vmatpush2.msra.mxu0 0.0
    %436 = vmatprep.subr.mxu0 0.0
    %437 = vmatpush2.msra.mxu0 0.0
    %438 = vmatprep.mubr.f32.mxu0 0.0
    %439 = vmatmul.mubr.f32.gmra.mxu0 %v369
    %v440 = vpop.f32.mrf.mxu0
    %v441 = vadd.f32 0.0, %v440
    %v442 = vpop.f32.mrf.mxu0
    %443 = vmatprep.mubr.f32.mxu0 0.0
    %444 = vmatmul.mubr.f32.gmra.mxu0 %v372
    %v445 = vpop.f32.mrf.mxu0
    %v446 = vadd.f32 0.0, %v445
    %v447 = vpop.f32.mrf.mxu0
    %448 = vdwg.mxu0
    %451 = vrot.lane.b32.xlu0 %v441, 96
    %v452 = vpop.permute.xlu0 %451
    %453 = vrot.lane.b32.xlu0 %v446, 96
    %v454 = vpop.permute.xlu0 %453
    %v457 = vadd.f32 %v360, %v452
    %v458 = vadd.f32 %v361, %v454
    %v459 = vmax.f32 %v457, 0.0
    %v460 = vmax.f32 %v458, 0.0
    %v461 = vld [vmem:[#allocation2 + $0x90] sm:$0xff]
    %v462 = vld [vmem:[#allocation2 + $0x98] sm:$0xff]
    %v463 = vld [vmem:[#allocation2 + $0xa0] sm:$0xff]
    %v464 = vld [vmem:[#allocation2 + $0xa8] sm:$0xff]
    %467 = vrot.lane.b32.xlu0 %v459, 32
    %v468 = vpop.permute.xlu0 %467
    %469 = vrot.lane.b32.xlu0 %v460, 32
    %v470 = vpop.permute.xlu0 %469
    %v471 = vsel %vm90, %v468, 0
    %v473 = vsel %vm90, %v470, 0
    %475 = vmatprep.subr.mxu0 0.0
    %476 = vmatpush1.msra.mxu0 0.0
    %477 = vmatprep.subr.mxu0 0.0
    %478 = vmatpush1.msra.mxu0 0.0
    %479 = vmatprep.subr.mxu0 0.0
    %480 = vmatpush1.msra.mxu0 0.0
    %481 = vmatprep.subr.mxu0 0.0
    %482 = vmatpush1.msra.mxu0 0.0
    %483 = vmatprep.subr.mxu0 0.0
    %484 = vmatpush1.msra.mxu0 0.0
    %485 = vmatprep.subr.mxu0 0.0
    %486 = vmatpush1.msra.mxu0 0.0
    %487 = vmatprep.subr.mxu0 0.0
    %488 = vmatpush1.msra.mxu0 0.0
    %489 = vmatprep.subr.mxu0 0.0
    %490 = vmatpush1.msra.mxu0 0.0
    %491 = vmatprep.subr.mxu0 0.0
    %492 = vmatpush1.msra.mxu0 0.0
    %493 = vmatprep.subr.mxu0 0.0
    %494 = vmatpush1.msra.mxu0 0.0
    %495 = vmatprep.subr.mxu0 0.0
    %496 = vmatpush1.msra.mxu0 0.0
    %497 = vmatprep.subr.mxu0 0.0
    %498 = vmatpush1.msra.mxu0 0.0
    %499 = vmatprep.subr.mxu0 0.0
    %500 = vmatpush1.msra.mxu0 %v464
    %501 = vmatprep.subr.mxu0 0.0
    %502 = vmatpush1.msra.mxu0 %v463
    %503 = vmatprep.subr.mxu0 0.0
    %504 = vmatpush1.msra.mxu0 %v462
    %505 = vmatprep.subr.mxu0 0.0
    %506 = vmatpush1.msra.mxu0 %v461
    %507 = vmatprep.subr.mxu0 0.0
    %508 = vmatpush2.msra.mxu0 0.0
    %509 = vmatprep.subr.mxu0 0.0
    %510 = vmatpush2.msra.mxu0 0.0
    %511 = vmatprep.subr.mxu0 0.0
    %512 = vmatpush2.msra.mxu0 0.0
    %513 = vmatprep.subr.mxu0 0.0
    %514 = vmatpush2.msra.mxu0 0.0
    %515 = vmatprep.subr.mxu0 0.0
    %516 = vmatpush2.msra.mxu0 0.0
    %517 = vmatprep.subr.mxu0 0.0
    %518 = vmatpush2.msra.mxu0 0.0
    %519 = vmatprep.subr.mxu0 0.0
    %520 = vmatpush2.msra.mxu0 0.0
    %521 = vmatprep.subr.mxu0 0.0
    %522 = vmatpush2.msra.mxu0 0.0
    %523 = vmatprep.subr.mxu0 0.0
    %524 = vmatpush2.msra.mxu0 0.0
    %525 = vmatprep.subr.mxu0 0.0
    %526 = vmatpush2.msra.mxu0 0.0
    %527 = vmatprep.subr.mxu0 0.0
    %528 = vmatpush2.msra.mxu0 0.0
    %529 = vmatprep.subr.mxu0 0.0
    %530 = vmatpush2.msra.mxu0 0.0
    %531 = vmatprep.subr.mxu0 0.0
    %532 = vmatpush2.msra.mxu0 0.0
    %533 = vmatprep.subr.mxu0 0.0
    %534 = vmatpush2.msra.mxu0 0.0
    %535 = vmatprep.subr.mxu0 0.0
    %536 = vmatpush2.msra.mxu0 0.0
    %537 = vmatprep.subr.mxu0 0.0
    %538 = vmatpush2.msra.mxu0 0.0
    %539 = vmatprep.mubr.f32.mxu0 0.0
    %540 = vmatmul.mubr.f32.gmra.mxu0 %v471
    %v541 = vpop.f32.mrf.mxu0
    %v542 = vadd.f32 0.0, %v541
    %v543 = vpop.f32.mrf.mxu0
    %544 = vmatprep.mubr.f32.mxu0 0.0
    %545 = vmatmul.mubr.f32.gmra.mxu0 %v473
    %v546 = vpop.f32.mrf.mxu0
    %v547 = vadd.f32 0.0, %v546
    %v548 = vpop.f32.mrf.mxu0
    %549 = vdwg.mxu0
    %550 = vmatprep.subr.mxu0 0.0
    %551 = vmatpush1.msra.mxu0 0.0
    %552 = vmatprep.subr.mxu0 0.0
    %553 = vmatpush1.msra.mxu0 0.0
    %554 = vmatprep.subr.mxu0 0.0
    %555 = vmatpush1.msra.mxu0 0.0
    %556 = vmatprep.subr.mxu0 0.0
    %557 = vmatpush1.msra.mxu0 0.0
    %558 = vmatprep.subr.mxu0 0.0
    %559 = vmatpush1.msra.mxu0 0.0
    %560 = vmatprep.subr.mxu0 0.0
    %561 = vmatpush1.msra.mxu0 0.0
    %562 = vmatprep.subr.mxu0 0.0
    %563 = vmatpush1.msra.mxu0 0.0
    %564 = vmatprep.subr.mxu0 0.0
    %565 = vmatpush1.msra.mxu0 0.0
    %566 = vmatprep.subr.mxu0 0.0
    %567 = vmatpush1.msra.mxu0 0.0
    %568 = vmatprep.subr.mxu0 0.0
    %569 = vmatpush1.msra.mxu0 0.0
    %570 = vmatprep.subr.mxu0 0.0
    %571 = vmatpush1.msra.mxu0 0.0
    %572 = vmatprep.subr.mxu0 0.0
    %573 = vmatpush1.msra.mxu0 0.0
    %574 = vmatprep.subr.mxu0 0.0
    %575 = vmatpush1.msra.mxu0 0.0
    %576 = vmatprep.subr.mxu0 0.0
    %577 = vmatpush1.msra.mxu0 0.0
    %578 = vmatprep.subr.mxu0 0.0
    %579 = vmatpush1.msra.mxu0 %v547
    %580 = vmatprep.subr.mxu0 0.0
    %581 = vmatpush1.msra.mxu0 %v542
    %582 = vmatprep.subr.mxu0 0.0
    %583 = vmatpush2.msra.mxu0 0.0
    %584 = vmatprep.subr.mxu0 0.0
    %585 = vmatpush2.msra.mxu0 0.0
    %586 = vmatprep.subr.mxu0 0.0
    %587 = vmatpush2.msra.mxu0 0.0
    %588 = vmatprep.subr.mxu0 0.0
    %589 = vmatpush2.msra.mxu0 0.0
    %590 = vmatprep.subr.mxu0 0.0
    %591 = vmatpush2.msra.mxu0 0.0
    %592 = vmatprep.subr.mxu0 0.0
    %593 = vmatpush2.msra.mxu0 0.0
    %594 = vmatprep.subr.mxu0 0.0
    %595 = vmatpush2.msra.mxu0 0.0
    %596 = vmatprep.subr.mxu0 0.0
    %597 = vmatpush2.msra.mxu0 0.0
    %598 = vmatprep.subr.mxu0 0.0
    %599 = vmatpush2.msra.mxu0 0.0
    %600 = vmatprep.subr.mxu0 0.0
    %601 = vmatpush2.msra.mxu0 0.0
    %602 = vmatprep.subr.mxu0 0.0
    %603 = vmatpush2.msra.mxu0 0.0
    %604 = vmatprep.subr.mxu0 0.0
    %605 = vmatpush2.msra.mxu0 0.0
    %606 = vmatprep.subr.mxu0 0.0
    %607 = vmatpush2.msra.mxu0 0.0
    %608 = vmatprep.subr.mxu0 0.0
    %609 = vmatpush2.msra.mxu0 0.0
    %610 = vmatprep.subr.mxu0 0.0
    %611 = vmatpush2.msra.mxu0 0.0
    %612 = vmatprep.subr.mxu0 0.0
    %613 = vmatpush2.msra.mxu0 0.0
    %614 = vmatprep.mubr.f32.mxu0 0.0
    %615 = vmatmul.mubr.f32.gmra.mxu0 %v173
    %v616 = vpop.f32.mrf.mxu0
    %v617 = vadd.f32 0.0, %v616
    %v618 = vpop.f32.mrf.mxu0
    %619 = vmatprep.mubr.f32.mxu0 0.0
    %620 = vmatmul.mubr.f32.gmra.mxu0 %v176
    %v621 = vpop.f32.mrf.mxu0
    %v622 = vadd.f32 0.0, %v621
    %v623 = vpop.f32.mrf.mxu0
    %624 = vdwg.mxu0
    %627 = vrot.lane.b32.xlu0 %v617, 96
    %v628 = vpop.permute.xlu0 %627
    %629 = vrot.lane.b32.xlu0 %v622, 96
    %v630 = vpop.permute.xlu0 %629
    %v633 = vadd.f32 %v542, %v628
    %v634 = vadd.f32 %v547, %v630
    %637 = vrot.lane.b32.xlu0 %v542, 96
    %v638 = vpop.permute.xlu0 %637
    %639 = vrot.lane.b32.xlu0 %v547, 96
    %v640 = vpop.permute.xlu0 %639
    %643 = vmatprep.subr.mxu0 0.0
    %644 = vmatpush1.msra.mxu0 0.0
    %645 = vmatprep.subr.mxu0 0.0
    %646 = vmatpush1.msra.mxu0 0.0
    %647 = vmatprep.subr.mxu0 0.0
    %648 = vmatpush1.msra.mxu0 0.0
    %649 = vmatprep.subr.mxu0 0.0
    %650 = vmatpush1.msra.mxu0 0.0
    %651 = vmatprep.subr.mxu0 0.0
    %652 = vmatpush1.msra.mxu0 0.0
    %653 = vmatprep.subr.mxu0 0.0
    %654 = vmatpush1.msra.mxu0 0.0
    %655 = vmatprep.subr.mxu0 0.0
    %656 = vmatpush1.msra.mxu0 0.0
    %657 = vmatprep.subr.mxu0 0.0
    %658 = vmatpush1.msra.mxu0 0.0
    %659 = vmatprep.subr.mxu0 0.0
    %660 = vmatpush1.msra.mxu0 0.0
    %661 = vmatprep.subr.mxu0 0.0
    %662 = vmatpush1.msra.mxu0 0.0
    %663 = vmatprep.subr.mxu0 0.0
    %664 = vmatpush1.msra.mxu0 0.0
    %665 = vmatprep.subr.mxu0 0.0
    %666 = vmatpush1.msra.mxu0 0.0
    %667 = vmatprep.subr.mxu0 0.0
    %668 = vmatpush1.msra.mxu0 0.0
    %669 = vmatprep.subr.mxu0 0.0
    %670 = vmatpush1.msra.mxu0 0.0
    %671 = vmatprep.subr.mxu0 0.0
    %672 = vmatpush1.msra.mxu0 %v640
    %673 = vmatprep.subr.mxu0 0.0
    %674 = vmatpush1.msra.mxu0 %v638
    %675 = vmatprep.subr.mxu0 0.0
    %676 = vmatpush2.msra.mxu0 0.0
    %677 = vmatprep.subr.mxu0 0.0
    %678 = vmatpush2.msra.mxu0 0.0
    %679 = vmatprep.subr.mxu0 0.0
    %680 = vmatpush2.msra.mxu0 0.0
    %681 = vmatprep.subr.mxu0 0.0
    %682 = vmatpush2.msra.mxu0 0.0
    %683 = vmatprep.subr.mxu0 0.0
    %684 = vmatpush2.msra.mxu0 0.0
    %685 = vmatprep.subr.mxu0 0.0
    %686 = vmatpush2.msra.mxu0 0.0
    %687 = vmatprep.subr.mxu0 0.0
    %688 = vmatpush2.msra.mxu0 0.0
    %689 = vmatprep.subr.mxu0 0.0
    %690 = vmatpush2.msra.mxu0 0.0
    %691 = vmatprep.subr.mxu0 0.0
    %692 = vmatpush2.msra.mxu0 0.0
    %693 = vmatprep.subr.mxu0 0.0
    %694 = vmatpush2.msra.mxu0 0.0
    %695 = vmatprep.subr.mxu0 0.0
    %696 = vmatpush2.msra.mxu0 0.0
    %697 = vmatprep.subr.mxu0 0.0
    %698 = vmatpush2.msra.mxu0 0.0
    %699 = vmatprep.subr.mxu0 0.0
    %700 = vmatpush2.msra.mxu0 0.0
    %701 = vmatprep.subr.mxu0 0.0
    %702 = vmatpush2.msra.mxu0 0.0
    %703 = vmatprep.subr.mxu0 0.0
    %704 = vmatpush2.msra.mxu0 0.0
    %705 = vmatprep.subr.mxu0 0.0
    %706 = vmatpush2.msra.mxu0 0.0
    %707 = vmatprep.mubr.f32.mxu0 0.0
    %708 = vmatmul.mubr.f32.gmra.mxu0 %v272
    %v709 = vpop.f32.mrf.mxu0
    %v710 = vadd.f32 0.0, %v709
    %v711 = vpop.f32.mrf.mxu0
    %712 = vmatprep.mubr.f32.mxu0 0.0
    %713 = vmatmul.mubr.f32.gmra.mxu0 %v275
    %v714 = vpop.f32.mrf.mxu0
    %v715 = vadd.f32 0.0, %v714
    %v716 = vpop.f32.mrf.mxu0
    %717 = vdwg.mxu0
    %720 = vrot.lane.b32.xlu0 %v710, 96
    %v721 = vpop.permute.xlu0 %720
    %722 = vrot.lane.b32.xlu0 %v715, 96
    %v723 = vpop.permute.xlu0 %722
    %v726 = vadd.f32 %v633, %v721
    %v727 = vadd.f32 %v634, %v723
    %728 = vrot.lane.b32.xlu0 %v542, 64
    %v729 = vpop.permute.xlu0 %728
    %730 = vrot.lane.b32.xlu0 %v547, 64
    %v731 = vpop.permute.xlu0 %730
    %734 = vmatprep.subr.mxu0 0.0
    %735 = vmatpush1.msra.mxu0 0.0
    %736 = vmatprep.subr.mxu0 0.0
    %737 = vmatpush1.msra.mxu0 0.0
    %738 = vmatprep.subr.mxu0 0.0
    %739 = vmatpush1.msra.mxu0 0.0
    %740 = vmatprep.subr.mxu0 0.0
    %741 = vmatpush1.msra.mxu0 0.0
    %742 = vmatprep.subr.mxu0 0.0
    %743 = vmatpush1.msra.mxu0 0.0
    %744 = vmatprep.subr.mxu0 0.0
    %745 = vmatpush1.msra.mxu0 0.0
    %746 = vmatprep.subr.mxu0 0.0
    %747 = vmatpush1.msra.mxu0 0.0
    %748 = vmatprep.subr.mxu0 0.0
    %749 = vmatpush1.msra.mxu0 0.0
    %750 = vmatprep.subr.mxu0 0.0
    %751 = vmatpush1.msra.mxu0 0.0
    %752 = vmatprep.subr.mxu0 0.0
    %753 = vmatpush1.msra.mxu0 0.0
    %754 = vmatprep.subr.mxu0 0.0
    %755 = vmatpush1.msra.mxu0 0.0
    %756 = vmatprep.subr.mxu0 0.0
    %757 = vmatpush1.msra.mxu0 0.0
    %758 = vmatprep.subr.mxu0 0.0
    %759 = vmatpush1.msra.mxu0 0.0
    %760 = vmatprep.subr.mxu0 0.0
    %761 = vmatpush1.msra.mxu0 0.0
    %762 = vmatprep.subr.mxu0 0.0
    %763 = vmatpush1.msra.mxu0 %v731
    %764 = vmatprep.subr.mxu0 0.0
    %765 = vmatpush1.msra.mxu0 %v729
    %766 = vmatprep.subr.mxu0 0.0
    %767 = vmatpush2.msra.mxu0 0.0
    %768 = vmatprep.subr.mxu0 0.0
    %769 = vmatpush2.msra.mxu0 0.0
    %770 = vmatprep.subr.mxu0 0.0
    %771 = vmatpush2.msra.mxu0 0.0
    %772 = vmatprep.subr.mxu0 0.0
    %773 = vmatpush2.msra.mxu0 0.0
    %774 = vmatprep.subr.mxu0 0.0
    %775 = vmatpush2.msra.mxu0 0.0
    %776 = vmatprep.subr.mxu0 0.0
    %777 = vmatpush2.msra.mxu0 0.0
    %778 = vmatprep.subr.mxu0 0.0
    %779 = vmatpush2.msra.mxu0 0.0
    %780 = vmatprep.subr.mxu0 0.0
    %781 = vmatpush2.msra.mxu0 0.0
    %782 = vmatprep.subr.mxu0 0.0
    %783 = vmatpush2.msra.mxu0 0.0
    %784 = vmatprep.subr.mxu0 0.0
    %785 = vmatpush2.msra.mxu0 0.0
    %786 = vmatprep.subr.mxu0 0.0
    %787 = vmatpush2.msra.mxu0 0.0
    %788 = vmatprep.subr.mxu0 0.0
    %789 = vmatpush2.msra.mxu0 0.0
    %790 = vmatprep.subr.mxu0 0.0
    %791 = vmatpush2.msra.mxu0 0.0
    %792 = vmatprep.subr.mxu0 0.0
    %793 = vmatpush2.msra.mxu0 0.0
    %794 = vmatprep.subr.mxu0 0.0
    %795 = vmatpush2.msra.mxu0 0.0
    %796 = vmatprep.subr.mxu0 0.0
    %797 = vmatpush2.msra.mxu0 0.0
    %798 = vmatprep.mubr.f32.mxu0 0.0
    %799 = vmatmul.mubr.f32.gmra.mxu0 %v369
    %v800 = vpop.f32.mrf.mxu0
    %v801 = vadd.f32 0.0, %v800
    %v802 = vpop.f32.mrf.mxu0
    %803 = vmatprep.mubr.f32.mxu0 0.0
    %804 = vmatmul.mubr.f32.gmra.mxu0 %v372
    %v805 = vpop.f32.mrf.mxu0
    %v806 = vadd.f32 0.0, %v805
    %v807 = vpop.f32.mrf.mxu0
    %808 = vdwg.mxu0
    %811 = vrot.lane.b32.xlu0 %v801, 96
    %v812 = vpop.permute.xlu0 %811
    %813 = vrot.lane.b32.xlu0 %v806, 96
    %v814 = vpop.permute.xlu0 %813
    %v817 = vadd.f32 %v726, %v812
    %v818 = vadd.f32 %v727, %v814
    %v819 = vmax.f32 %v817, 0.0
    %v820 = vmax.f32 %v818, 0.0
    %823 = vrot.lane.b32.xlu0 %v819, 32
    %v824 = vpop.permute.xlu0 %823
    %825 = vrot.lane.b32.xlu0 %v820, 32
    %v826 = vpop.permute.xlu0 %825
    %829 = vst.msk [vmem:[#allocation6] sm:$0xff] %vm90, %v824
    %830 = vst.msk [vmem:[#allocation6 + $0x8] sm:$0xff] %vm90, %v826
    %v831 = vld [vmem:[%s0] sm:$0x3]
    %v832 = vld [vmem:[#allocation2 + $0x40] sm:$0xff]
    %v833 = vld [vmem:[#allocation2 + $0x48] sm:$0xff]
    %v834 = vld [vmem:[#allocation2 + $0x50] sm:$0xff]
    %v835 = vld [vmem:[#allocation2 + $0x58] sm:$0xff]
    %v837 = vsel %vm90, %v831, 0
    %839 = vmatprep.subr.mxu0 0.0
    %840 = vmatpush1.msra.mxu0 0.0
    %841 = vmatprep.subr.mxu0 0.0
    %842 = vmatpush1.msra.mxu0 0.0
    %843 = vmatprep.subr.mxu0 0.0
    %844 = vmatpush1.msra.mxu0 0.0
    %845 = vmatprep.subr.mxu0 0.0
    %846 = vmatpush1.msra.mxu0 0.0
    %847 = vmatprep.subr.mxu0 0.0
    %848 = vmatpush1.msra.mxu0 0.0
    %849 = vmatprep.subr.mxu0 0.0
    %850 = vmatpush1.msra.mxu0 0.0
    %851 = vmatprep.subr.mxu0 0.0
    %852 = vmatpush1.msra.mxu0 0.0
    %853 = vmatprep.subr.mxu0 0.0
    %854 = vmatpush1.msra.mxu0 0.0
    %855 = vmatprep.subr.mxu0 0.0
    %856 = vmatpush1.msra.mxu0 0.0
    %857 = vmatprep.subr.mxu0 0.0
    %858 = vmatpush1.msra.mxu0 0.0
    %859 = vmatprep.subr.mxu0 0.0
    %860 = vmatpush1.msra.mxu0 0.0
    %861 = vmatprep.subr.mxu0 0.0
    %862 = vmatpush1.msra.mxu0 0.0
    %863 = vmatprep.subr.mxu0 0.0
    %864 = vmatpush1.msra.mxu0 %v835
    %865 = vmatprep.subr.mxu0 0.0
    %866 = vmatpush1.msra.mxu0 %v834
    %867 = vmatprep.subr.mxu0 0.0
    %868 = vmatpush1.msra.mxu0 %v833
    %869 = vmatprep.subr.mxu0 0.0
    %870 = vmatpush1.msra.mxu0 %v832
    %871 = vmatprep.subr.mxu0 0.0
    %872 = vmatpush2.msra.mxu0 0.0
    %873 = vmatprep.subr.mxu0 0.0
    %874 = vmatpush2.msra.mxu0 0.0
    %875 = vmatprep.subr.mxu0 0.0
    %876 = vmatpush2.msra.mxu0 0.0
    %877 = vmatprep.subr.mxu0 0.0
    %878 = vmatpush2.msra.mxu0 0.0
    %879 = vmatprep.subr.mxu0 0.0
    %880 = vmatpush2.msra.mxu0 0.0
    %881 = vmatprep.subr.mxu0 0.0
    %882 = vmatpush2.msra.mxu0 0.0
    %883 = vmatprep.subr.mxu0 0.0
    %884 = vmatpush2.msra.mxu0 0.0
    %885 = vmatprep.subr.mxu0 0.0
    %886 = vmatpush2.msra.mxu0 0.0
    %887 = vmatprep.subr.mxu0 0.0
    %888 = vmatpush2.msra.mxu0 0.0
    %889 = vmatprep.subr.mxu0 0.0
    %890 = vmatpush2.msra.mxu0 0.0
    %891 = vmatprep.subr.mxu0 0.0
    %892 = vmatpush2.msra.mxu0 0.0
    %893 = vmatprep.subr.mxu0 0.0
    %894 = vmatpush2.msra.mxu0 0.0
    %895 = vmatprep.subr.mxu0 0.0
    %896 = vmatpush2.msra.mxu0 0.0
    %897 = vmatprep.subr.mxu0 0.0
    %898 = vmatpush2.msra.mxu0 0.0
    %899 = vmatprep.subr.mxu0 0.0
    %900 = vmatpush2.msra.mxu0 0.0
    %901 = vmatprep.subr.mxu0 0.0
    %902 = vmatpush2.msra.mxu0 0.0
    %903 = vmatprep.mubr.f32.mxu0 0.0
    %904 = vmatmul.mubr.f32.gmra.mxu0 %v837
    %v905 = vpop.f32.mrf.mxu0
    %v906 = vadd.f32 0.0, %v905
    %v907 = vpop.f32.mrf.mxu0
    %908 = vdwg.mxu0
    %v911 = vunpack.c.l.s4 1966171168
    %v912 = vunpack.c.0.s8 %v911
    %v913 = vlaneseq
    %v914 = vshrl.u32 %v913, 7
    %v915 = vsub.s32 %v912, %v914
    %v916 = vrot.slane %v906, %v915
    %v917 = vcombine.high %v916, %v916
    %v919 = vunpack.c.l.s4 1966171168
    %v920 = vunpack.c.0.s8 %v919
    %v921 = vlaneseq
    %v922 = vshrl.u32 %v921, 7
    %v923 = vsub.s32 %v920, %v922
    %v924 = vrot.slane %v916, %v923
    %v926 = vunpack.c.l.s4 1966171168
    %v927 = vunpack.c.0.s8 %v926
    %v928 = vlaneseq
    %v929 = vshrl.u32 %v928, 7
    %v930 = vsub.s32 %v927, %v929
    %v931 = vrot.slane %v917, %v930
    %v932 = vlaneseq
    %v933 = vshrl.u32 %v932, 7
    %v934 = vsub.s32 0, %v933
    %v935 = vrot.slane %v924, %v934
    %v936 = vlaneseq
    %v937 = vshrl.u32 %v936, 7
    %v938 = vsub.s32 0, %v937
    %v939 = vrot.slane %v931, %v938
    %v942 = vld [vmem:[#allocation2 + $0x20] sm:$0xff]
    %v943 = vld [vmem:[#allocation2 + $0x28] sm:$0xff]
    %v944 = vld [vmem:[#allocation2 + $0x30] sm:$0xff]
    %v945 = vld [vmem:[#allocation2 + $0x38] sm:$0xff]
    %v946 = vsel %vm90, %v824, 0
    %v948 = vsel %vm90, %v826, 0
    %950 = vmatprep.subr.mxu0 0.0
    %951 = vmatpush1.msra.mxu0 0.0
    %952 = vmatprep.subr.mxu0 0.0
    %953 = vmatpush1.msra.mxu0 0.0
    %954 = vmatprep.subr.mxu0 0.0
    %955 = vmatpush1.msra.mxu0 0.0
    %956 = vmatprep.subr.mxu0 0.0
    %957 = vmatpush1.msra.mxu0 0.0
    %958 = vmatprep.subr.mxu0 0.0
    %959 = vmatpush1.msra.mxu0 0.0
    %960 = vmatprep.subr.mxu0 0.0
    %961 = vmatpush1.msra.mxu0 0.0
    %962 = vmatprep.subr.mxu0 0.0
    %963 = vmatpush1.msra.mxu0 0.0
    %964 = vmatprep.subr.mxu0 0.0
    %965 = vmatpush1.msra.mxu0 0.0
    %966 = vmatprep.subr.mxu0 0.0
    %967 = vmatpush1.msra.mxu0 0.0
    %968 = vmatprep.subr.mxu0 0.0
    %969 = vmatpush1.msra.mxu0 0.0
    %970 = vmatprep.subr.mxu0 0.0
    %971 = vmatpush1.msra.mxu0 0.0
    %972 = vmatprep.subr.mxu0 0.0
    %973 = vmatpush1.msra.mxu0 0.0
    %974 = vmatprep.subr.mxu0 0.0
    %975 = vmatpush1.msra.mxu0 %v945
    %976 = vmatprep.subr.mxu0 0.0
    %977 = vmatpush1.msra.mxu0 %v944
    %978 = vmatprep.subr.mxu0 0.0
    %979 = vmatpush1.msra.mxu0 %v943
    %980 = vmatprep.subr.mxu0 0.0
    %981 = vmatpush1.msra.mxu0 %v942
    %982 = vmatprep.subr.mxu0 0.0
    %983 = vmatpush2.msra.mxu0 0.0
    %984 = vmatprep.subr.mxu0 0.0
    %985 = vmatpush2.msra.mxu0 0.0
    %986 = vmatprep.subr.mxu0 0.0
    %987 = vmatpush2.msra.mxu0 0.0
    %988 = vmatprep.subr.mxu0 0.0
    %989 = vmatpush2.msra.mxu0 0.0
    %990 = vmatprep.subr.mxu0 0.0
    %991 = vmatpush2.msra.mxu0 0.0
    %992 = vmatprep.subr.mxu0 0.0
    %993 = vmatpush2.msra.mxu0 0.0
    %994 = vmatprep.subr.mxu0 0.0
    %995 = vmatpush2.msra.mxu0 0.0
    %996 = vmatprep.subr.mxu0 0.0
    %997 = vmatpush2.msra.mxu0 0.0
    %998 = vmatprep.subr.mxu0 0.0
    %999 = vmatpush2.msra.mxu0 0.0
    %1000 = vmatprep.subr.mxu0 0.0
    %1001 = vmatpush2.msra.mxu0 0.0
    %1002 = vmatprep.subr.mxu0 0.0
    %1003 = vmatpush2.msra.mxu0 0.0
    %1004 = vmatprep.subr.mxu0 0.0
    %1005 = vmatpush2.msra.mxu0 0.0
    %1006 = vmatprep.subr.mxu0 0.0
    %1007 = vmatpush2.msra.mxu0 0.0
    %1008 = vmatprep.subr.mxu0 0.0
    %1009 = vmatpush2.msra.mxu0 0.0
    %1010 = vmatprep.subr.mxu0 0.0
    %1011 = vmatpush2.msra.mxu0 0.0
    %1012 = vmatprep.subr.mxu0 0.0
    %1013 = vmatpush2.msra.mxu0 0.0
    %1014 = vmatprep.mubr.f32.mxu0 0.0
    %1015 = vmatmul.mubr.f32.gmra.mxu0 %v946
    %v1016 = vpop.f32.mrf.mxu0
    %v1017 = vadd.f32 %v935, %v1016
    %v1018 = vpop.f32.mrf.mxu0
    %1019 = vmatprep.mubr.f32.mxu0 0.0
    %1020 = vmatmul.mubr.f32.gmra.mxu0 %v948
    %v1021 = vpop.f32.mrf.mxu0
    %v1022 = vadd.f32 %v939, %v1021
    %v1023 = vpop.f32.mrf.mxu0
    %1024 = vdwg.mxu0
    %v1025 = vtanh.pop %v1017
    %v1026 = vtanh.pop %v1022
    %v1027 = vld [vmem:[#allocation2 + $0x60] sm:$0xff]
    %v1028 = vld [vmem:[#allocation2 + $0x68] sm:$0xff]
    %v1029 = vld [vmem:[#allocation2 + $0x70] sm:$0xff]
    %v1030 = vld [vmem:[#allocation2 + $0x78] sm:$0xff]
    %v1032 = vsel %vm90, %v1025, 0
    %v1035 = vsel %vm90, %v1026, 0
    %1037 = vmatprep.subr.mxu0 0.0
    %1038 = vmatpush1.msra.mxu0 0.0
    %1039 = vmatprep.subr.mxu0 0.0
    %1040 = vmatpush1.msra.mxu0 0.0
    %1041 = vmatprep.subr.mxu0 0.0
    %1042 = vmatpush1.msra.mxu0 0.0
    %1043 = vmatprep.subr.mxu0 0.0
    %1044 = vmatpush1.msra.mxu0 0.0
    %1045 = vmatprep.subr.mxu0 0.0
    %1046 = vmatpush1.msra.mxu0 0.0
    %1047 = vmatprep.subr.mxu0 0.0
    %1048 = vmatpush1.msra.mxu0 0.0
    %1049 = vmatprep.subr.mxu0 0.0
    %1050 = vmatpush1.msra.mxu0 0.0
    %1051 = vmatprep.subr.mxu0 0.0
    %1052 = vmatpush1.msra.mxu0 0.0
    %1053 = vmatprep.subr.mxu0 0.0
    %1054 = vmatpush1.msra.mxu0 0.0
    %1055 = vmatprep.subr.mxu0 0.0
    %1056 = vmatpush1.msra.mxu0 0.0
    %1057 = vmatprep.subr.mxu0 0.0
    %1058 = vmatpush1.msra.mxu0 0.0
    %1059 = vmatprep.subr.mxu0 0.0
    %1060 = vmatpush1.msra.mxu0 0.0
    %1061 = vmatprep.subr.mxu0 0.0
    %1062 = vmatpush1.msra.mxu0 %v1030
    %1063 = vmatprep.subr.mxu0 0.0
    %1064 = vmatpush1.msra.mxu0 %v1029
    %1065 = vmatprep.subr.mxu0 0.0
    %1066 = vmatpush1.msra.mxu0 %v1028
    %1067 = vmatprep.subr.mxu0 0.0
    %1068 = vmatpush1.msra.mxu0 %v1027
    %1069 = vmatprep.subr.mxu0 0.0
    %1070 = vmatpush2.msra.mxu0 0.0
    %1071 = vmatprep.subr.mxu0 0.0
    %1072 = vmatpush2.msra.mxu0 0.0
    %1073 = vmatprep.subr.mxu0 0.0
    %1074 = vmatpush2.msra.mxu0 0.0
    %1075 = vmatprep.subr.mxu0 0.0
    %1076 = vmatpush2.msra.mxu0 0.0
    %1077 = vmatprep.subr.mxu0 0.0
    %1078 = vmatpush2.msra.mxu0 0.0
    %1079 = vmatprep.subr.mxu0 0.0
    %1080 = vmatpush2.msra.mxu0 0.0
    %1081 = vmatprep.subr.mxu0 0.0
    %1082 = vmatpush2.msra.mxu0 0.0
    %1083 = vmatprep.subr.mxu0 0.0
    %1084 = vmatpush2.msra.mxu0 0.0
    %1085 = vmatprep.subr.mxu0 0.0
    %1086 = vmatpush2.msra.mxu0 0.0
    %1087 = vmatprep.subr.mxu0 0.0
    %1088 = vmatpush2.msra.mxu0 0.0
    %1089 = vmatprep.subr.mxu0 0.0
    %1090 = vmatpush2.msra.mxu0 0.0
    %1091 = vmatprep.subr.mxu0 0.0
    %1092 = vmatpush2.msra.mxu0 0.0
    %1093 = vmatprep.subr.mxu0 0.0
    %1094 = vmatpush2.msra.mxu0 0.0
    %1095 = vmatprep.subr.mxu0 0.0
    %1096 = vmatpush2.msra.mxu0 0.0
    %1097 = vmatprep.subr.mxu0 0.0
    %1098 = vmatpush2.msra.mxu0 0.0
    %1099 = vmatprep.subr.mxu0 0.0
    %1100 = vmatpush2.msra.mxu0 0.0
    %1101 = vmatprep.mubr.f32.mxu0 0.0
    %1102 = vmatmul.mubr.f32.gmra.mxu0 %v1032
    %v1103 = vpop.f32.mrf.mxu0
    %v1104 = vadd.f32 0.0, %v1103
    %v1105 = vpop.f32.mrf.mxu0
    %1106 = vmatprep.mubr.f32.mxu0 0.0
    %1107 = vmatmul.mubr.f32.gmra.mxu0 %v1035
    %v1108 = vpop.f32.mrf.mxu0
    %v1109 = vadd.f32 0.0, %v1108
    %v1110 = vpop.f32.mrf.mxu0
    %1111 = vdwg.mxu0
    %v1112 = vtanh.pop %v1104
    %v1113 = vtanh.pop %v1109
    %v1114 = vld [vmem:[#allocation2 + $0x80] sm:$0xff]
    %v1115 = vld [vmem:[#allocation2 + $0x88] sm:$0xff]
    %v1117 = vsel %vm49, %v1112, 0
    %v1120 = vsel %vm49, %v1113, 0
    %1122 = vmatprep.subr.mxu0 0.0
    %1123 = vmatpush1.msra.mxu0 0.0
    %1124 = vmatprep.subr.mxu0 0.0
    %1125 = vmatpush1.msra.mxu0 0.0
    %1126 = vmatprep.subr.mxu0 0.0
    %1127 = vmatpush1.msra.mxu0 0.0
    %1128 = vmatprep.subr.mxu0 0.0
    %1129 = vmatpush1.msra.mxu0 0.0
    %1130 = vmatprep.subr.mxu0 0.0
    %1131 = vmatpush1.msra.mxu0 0.0
    %1132 = vmatprep.subr.mxu0 0.0
    %1133 = vmatpush1.msra.mxu0 0.0
    %1134 = vmatprep.subr.mxu0 0.0
    %1135 = vmatpush1.msra.mxu0 0.0
    %1136 = vmatprep.subr.mxu0 0.0
    %1137 = vmatpush1.msra.mxu0 0.0
    %1138 = vmatprep.subr.mxu0 0.0
    %1139 = vmatpush1.msra.mxu0 0.0
    %1140 = vmatprep.subr.mxu0 0.0
    %1141 = vmatpush1.msra.mxu0 0.0
    %1142 = vmatprep.subr.mxu0 0.0
    %1143 = vmatpush1.msra.mxu0 0.0
    %1144 = vmatprep.subr.mxu0 0.0
    %1145 = vmatpush1.msra.mxu0 0.0
    %1146 = vmatprep.subr.mxu0 0.0
    %1147 = vmatpush1.msra.mxu0 0.0
    %1148 = vmatprep.subr.mxu0 0.0
    %1149 = vmatpush1.msra.mxu0 0.0
    %1150 = vmatprep.subr.mxu0 0.0
    %1151 = vmatpush1.msra.mxu0 %v1115
    %1152 = vmatprep.subr.mxu0 0.0
    %1153 = vmatpush1.msra.mxu0 %v1114
    %1154 = vmatprep.subr.mxu0 0.0
    %1155 = vmatpush2.msra.mxu0 0.0
    %1156 = vmatprep.subr.mxu0 0.0
    %1157 = vmatpush2.msra.mxu0 0.0
    %1158 = vmatprep.subr.mxu0 0.0
    %1159 = vmatpush2.msra.mxu0 0.0
    %1160 = vmatprep.subr.mxu0 0.0
    %1161 = vmatpush2.msra.mxu0 0.0
    %1162 = vmatprep.subr.mxu0 0.0
    %1163 = vmatpush2.msra.mxu0 0.0
    %1164 = vmatprep.subr.mxu0 0.0
    %1165 = vmatpush2.msra.mxu0 0.0
    %1166 = vmatprep.subr.mxu0 0.0
    %1167 = vmatpush2.msra.mxu0 0.0
    %1168 = vmatprep.subr.mxu0 0.0
    %1169 = vmatpush2.msra.mxu0 0.0
    %1170 = vmatprep.subr.mxu0 0.0
    %1171 = vmatpush2.msra.mxu0 0.0
    %1172 = vmatprep.subr.mxu0 0.0
    %1173 = vmatpush2.msra.mxu0 0.0
    %1174 = vmatprep.subr.mxu0 0.0
    %1175 = vmatpush2.msra.mxu0 0.0
    %1176 = vmatprep.subr.mxu0 0.0
    %1177 = vmatpush2.msra.mxu0 0.0
    %1178 = vmatprep.subr.mxu0 0.0
    %1179 = vmatpush2.msra.mxu0 0.0
    %1180 = vmatprep.subr.mxu0 0.0
    %1181 = vmatpush2.msra.mxu0 0.0
    %1182 = vmatprep.subr.mxu0 0.0
    %1183 = vmatpush2.msra.mxu0 0.0
    %1184 = vmatprep.subr.mxu0 0.0
    %1185 = vmatpush2.msra.mxu0 0.0
    %1186 = vmatprep.mubr.f32.mxu0 0.0
    %1187 = vmatmul.mubr.f32.gmra.mxu0 %v1117
    %v1188 = vpop.f32.mrf.mxu0
    %v1189 = vadd.f32 0.0, %v1188
    %v1190 = vpop.f32.mrf.mxu0
    %1191 = vmatprep.mubr.f32.mxu0 0.0
    %1192 = vmatmul.mubr.f32.gmra.mxu0 %v1120
    %v1193 = vpop.f32.mrf.mxu0
    %v1194 = vadd.f32 0.0, %v1193
    %v1195 = vpop.f32.mrf.mxu0
    %1196 = vdwg.mxu0
    %vm1197 = vcmp.gt.f32.partialorder %v41, 0.0
    %vm1198 = vcmp.gt.f32.partialorder %v42, 0.0
    %v1199 = vsel %vm1197, %v1189, -3.4028235e+38
    %v1200 = vsel %vm1198, %v1194, -3.4028235e+38
    %vm1201 = vcmask 7168
    %v1202 = vsel %vm1201, %v1199, -inf
    %v1203 = vrot.slane %v1202, 4
    %v1204 = vmax.f32 %v1202, %v1203
    %v1205 = vrot.slane %v1204, 2
    %v1206 = vmax.f32 %v1204, %v1205
    %v1207 = vrot.slane %v1206, 1
    %v1208 = vmax.f32 %v1206, %v1207
    %v1209 = vsel %vm1201, %v1200, -inf
    %v1210 = vrot.slane %v1209, 4
    %v1211 = vmax.f32 %v1209, %v1210
    %v1212 = vrot.slane %v1211, 2
    %v1213 = vmax.f32 %v1211, %v1212
    %v1214 = vrot.slane %v1213, 1
    %v1215 = vmax.f32 %v1213, %v1214
    %v1216 = vsub.f32 %v1199, %v1208
    %v1217 = vsub.f32 %v1200, %v1215
    %v1218 = vmul.f32 %v1216, 1.442695
    %v1219 = vpow.pop %v1218
    %v1220 = vmul.f32 %v1217, 1.442695
    %v1221 = vpow.pop %v1220
    %v1222 = vsel %vm1201, %v1219, 0.0
    %v1223 = vrot.slane %v1222, 4
    %v1224 = vadd.f32 %v1222, %v1223
    %v1225 = vrot.slane %v1224, 2
    %v1226 = vadd.f32 %v1224, %v1225
    %v1227 = vrot.slane %v1226, 1
    %v1228 = vadd.f32 %v1226, %v1227
    %v1229 = vsel %vm1201, %v1221, 0.0
    %v1230 = vrot.slane %v1229, 4
    %v1231 = vadd.f32 %v1229, %v1230
    %v1232 = vrot.slane %v1231, 2
    %v1233 = vadd.f32 %v1231, %v1232
    %v1234 = vrot.slane %v1233, 1
    %v1235 = vadd.f32 %v1233, %v1234
    %v1236 = vrcp.pop %v1228
    %v1237 = vrcp.pop %v1235
    %v1238 = vmul.f32 %v1219, %v1236
    %v1239 = vmul.f32 %v1221, %v1237
    %1241 = vset.pattern.permute.xlu0 0
    %1242 = vperm.xlu0 %1241, %v1238
    %v1243 = vpop.permute.xlu0 %1242
    %1246 = vset.pattern.permute.xlu0 0
    %1247 = vperm.xlu0 %1246, %v1239
    %v1248 = vpop.permute.xlu0 %1247
    %v1250 = vmul.f32 %v1243, %v819
    %v1251 = vmul.f32 %v1248, %v820
    %vm1252 = vcmask 1048320
    %v1253 = vsel %vm1252, %v1250, 0.0
    %v1254 = vrot.slane %v1253, 4
    %v1255 = vadd.f32 %v1253, %v1254
    %v1256 = vrot.slane %v1255, 2
    %v1257 = vadd.f32 %v1255, %v1256
    %v1258 = vrot.slane %v1257, 1
    %v1259 = vadd.f32 %v1257, %v1258
    %v1260 = vsel %vm1252, %v1251, 0.0
    %v1261 = vrot.slane %v1260, 4
    %v1262 = vadd.f32 %v1260, %v1261
    %v1263 = vrot.slane %v1262, 2
    %v1264 = vadd.f32 %v1262, %v1263
    %v1265 = vrot.slane %v1264, 1
    %v1266 = vadd.f32 %v1264, %v1265
    %vm1269 = vcmask 1041409
    %v1270 = vsel %vm1269, %v1266, %v1259
    %1271 = vrot.lane.b32.xlu0 %v1270, 32
    %v1272 = vpop.permute.xlu0 %1271
    %v1274 = vadd.f32 %v831, %v1272
    %v1275 = vld [vmem:[#allocation2 + $0xd0] sm:$0xff]
    %v1276 = vld [vmem:[#allocation2 + $0xd8] sm:$0xff]
    %v1277 = vld [vmem:[#allocation2 + $0xe0] sm:$0xff]
    %v1278 = vld [vmem:[#allocation2 + $0xe8] sm:$0xff]
    %v1280 = vsel %vm90, %v1274, 0
    %1282 = vmatprep.subr.mxu0 0.0
    %1283 = vmatpush1.msra.mxu0 0.0
    %1284 = vmatprep.subr.mxu0 0.0
    %1285 = vmatpush1.msra.mxu0 0.0
    %1286 = vmatprep.subr.mxu0 0.0
    %1287 = vmatpush1.msra.mxu0 0.0
    %1288 = vmatprep.subr.mxu0 0.0
    %1289 = vmatpush1.msra.mxu0 0.0
    %1290 = vmatprep.subr.mxu0 0.0
    %1291 = vmatpush1.msra.mxu0 0.0
    %1292 = vmatprep.subr.mxu0 0.0
    %1293 = vmatpush1.msra.mxu0 0.0
    %1294 = vmatprep.subr.mxu0 0.0
    %1295 = vmatpush1.msra.mxu0 0.0
    %1296 = vmatprep.subr.mxu0 0.0
    %1297 = vmatpush1.msra.mxu0 0.0
    %1298 = vmatprep.subr.mxu0 0.0
    %1299 = vmatpush1.msra.mxu0 0.0
    %1300 = vmatprep.subr.mxu0 0.0
    %1301 = vmatpush1.msra.mxu0 0.0
    %1302 = vmatprep.subr.mxu0 0.0
    %1303 = vmatpush1.msra.mxu0 0.0
    %1304 = vmatprep.subr.mxu0 0.0
    %1305 = vmatpush1.msra.mxu0 0.0
    %1306 = vmatprep.subr.mxu0 0.0
    %1307 = vmatpush1.msra.mxu0 %v1278
    %1308 = vmatprep.subr.mxu0 0.0
    %1309 = vmatpush1.msra.mxu0 %v1277
    %1310 = vmatprep.subr.mxu0 0.0
    %1311 = vmatpush1.msra.mxu0 %v1276
    %1312 = vmatprep.subr.mxu0 0.0
    %1313 = vmatpush1.msra.mxu0 %v1275
    %1314 = vmatprep.subr.mxu0 0.0
    %1315 = vmatpush2.msra.mxu0 0.0
    %1316 = vmatprep.subr.mxu0 0.0
    %1317 = vmatpush2.msra.mxu0 0.0
    %1318 = vmatprep.subr.mxu0 0.0
    %1319 = vmatpush2.msra.mxu0 0.0
    %1320 = vmatprep.subr.mxu0 0.0
    %1321 = vmatpush2.msra.mxu0 0.0
    %1322 = vmatprep.subr.mxu0 0.0
    %1323 = vmatpush2.msra.mxu0 0.0
    %1324 = vmatprep.subr.mxu0 0.0
    %1325 = vmatpush2.msra.mxu0 0.0
    %1326 = vmatprep.subr.mxu0 0.0
    %1327 = vmatpush2.msra.mxu0 0.0
    %1328 = vmatprep.subr.mxu0 0.0
    %1329 = vmatpush2.msra.mxu0 0.0
    %1330 = vmatprep.subr.mxu0 0.0
    %1331 = vmatpush2.msra.mxu0 0.0
    %1332 = vmatprep.subr.mxu0 0.0
    %1333 = vmatpush2.msra.mxu0 0.0
    %1334 = vmatprep.subr.mxu0 0.0
    %1335 = vmatpush2.msra.mxu0 0.0
    %1336 = vmatprep.subr.mxu0 0.0
    %1337 = vmatpush2.msra.mxu0 0.0
    %1338 = vmatprep.subr.mxu0 0.0
    %1339 = vmatpush2.msra.mxu0 0.0
    %1340 = vmatprep.subr.mxu0 0.0
    %1341 = vmatpush2.msra.mxu0 0.0
    %1342 = vmatprep.subr.mxu0 0.0
    %1343 = vmatpush2.msra.mxu0 0.0
    %1344 = vmatprep.subr.mxu0 0.0
    %1345 = vmatpush2.msra.mxu0 0.0
    %1346 = vmatprep.mubr.f32.mxu0 0.0
    %1347 = vmatmul.mubr.f32.gmra.mxu0 %v1280
    %v1348 = vpop.f32.mrf.mxu0
    %v1349 = vadd.f32 0.0, %v1348
    %v1350 = vpop.f32.mrf.mxu0
    %1351 = vdwg.mxu0
    %v1354 = vunpack.c.l.s4 1966171168
    %v1355 = vunpack.c.0.s8 %v1354
    %v1356 = vlaneseq
    %v1357 = vshrl.u32 %v1356, 7
    %v1358 = vsub.s32 %v1355, %v1357
    %v1359 = vrot.slane %v1349, %v1358
    %v1360 = vcombine.high %v1359, %v1359
    %v1362 = vunpack.c.l.s4 1966171168
    %v1363 = vunpack.c.0.s8 %v1362
    %v1364 = vlaneseq
    %v1365 = vshrl.u32 %v1364, 7
    %v1366 = vsub.s32 %v1363, %v1365
    %v1367 = vrot.slane %v1359, %v1366
    %v1369 = vunpack.c.l.s4 1966171168
    %v1370 = vunpack.c.0.s8 %v1369
    %v1371 = vlaneseq
    %v1372 = vshrl.u32 %v1371, 7
    %v1373 = vsub.s32 %v1370, %v1372
    %v1374 = vrot.slane %v1360, %v1373
    %v1375 = vlaneseq
    %v1376 = vshrl.u32 %v1375, 7
    %v1377 = vsub.s32 0, %v1376
    %v1378 = vrot.slane %v1367, %v1377
    %v1379 = vlaneseq
    %v1380 = vshrl.u32 %v1379, 7
    %v1381 = vsub.s32 0, %v1380
    %v1382 = vrot.slane %v1374, %v1381
    %v1385 = vld [vmem:[#allocation2 + $0xb0] sm:$0xff]
    %v1386 = vld [vmem:[#allocation2 + $0xb8] sm:$0xff]
    %v1387 = vld [vmem:[#allocation2 + $0xc0] sm:$0xff]
    %v1388 = vld [vmem:[#allocation2 + $0xc8] sm:$0xff]
    %1389 = vmatprep.subr.mxu0 0.0
    %1390 = vmatpush1.msra.mxu0 0.0
    %1391 = vmatprep.subr.mxu0 0.0
    %1392 = vmatpush1.msra.mxu0 0.0
    %1393 = vmatprep.subr.mxu0 0.0
    %1394 = vmatpush1.msra.mxu0 0.0
    %1395 = vmatprep.subr.mxu0 0.0
    %1396 = vmatpush1.msra.mxu0 0.0
    %1397 = vmatprep.subr.mxu0 0.0
    %1398 = vmatpush1.msra.mxu0 0.0
    %1399 = vmatprep.subr.mxu0 0.0
    %1400 = vmatpush1.msra.mxu0 0.0
    %1401 = vmatprep.subr.mxu0 0.0
    %1402 = vmatpush1.msra.mxu0 0.0
    %1403 = vmatprep.subr.mxu0 0.0
    %1404 = vmatpush1.msra.mxu0 0.0
    %1405 = vmatprep.subr.mxu0 0.0
    %1406 = vmatpush1.msra.mxu0 0.0
    %1407 = vmatprep.subr.mxu0 0.0
    %1408 = vmatpush1.msra.mxu0 0.0
    %1409 = vmatprep.subr.mxu0 0.0
    %1410 = vmatpush1.msra.mxu0 0.0
    %1411 = vmatprep.subr.mxu0 0.0
    %1412 = vmatpush1.msra.mxu0 0.0
    %1413 = vmatprep.subr.mxu0 0.0
    %1414 = vmatpush1.msra.mxu0 %v1388
    %1415 = vmatprep.subr.mxu0 0.0
    %1416 = vmatpush1.msra.mxu0 %v1387
    %1417 = vmatprep.subr.mxu0 0.0
    %1418 = vmatpush1.msra.mxu0 %v1386
    %1419 = vmatprep.subr.mxu0 0.0
    %1420 = vmatpush1.msra.mxu0 %v1385
    %1421 = vmatprep.subr.mxu0 0.0
    %1422 = vmatpush2.msra.mxu0 0.0
    %1423 = vmatprep.subr.mxu0 0.0
    %1424 = vmatpush2.msra.mxu0 0.0
    %1425 = vmatprep.subr.mxu0 0.0
    %1426 = vmatpush2.msra.mxu0 0.0
    %1427 = vmatprep.subr.mxu0 0.0
    %1428 = vmatpush2.msra.mxu0 0.0
    %1429 = vmatprep.subr.mxu0 0.0
    %1430 = vmatpush2.msra.mxu0 0.0
    %1431 = vmatprep.subr.mxu0 0.0
    %1432 = vmatpush2.msra.mxu0 0.0
    %1433 = vmatprep.subr.mxu0 0.0
    %1434 = vmatpush2.msra.mxu0 0.0
    %1435 = vmatprep.subr.mxu0 0.0
    %1436 = vmatpush2.msra.mxu0 0.0
    %1437 = vmatprep.subr.mxu0 0.0
    %1438 = vmatpush2.msra.mxu0 0.0
    %1439 = vmatprep.subr.mxu0 0.0
    %1440 = vmatpush2.msra.mxu0 0.0
    %1441 = vmatprep.subr.mxu0 0.0
    %1442 = vmatpush2.msra.mxu0 0.0
    %1443 = vmatprep.subr.mxu0 0.0
    %1444 = vmatpush2.msra.mxu0 0.0
    %1445 = vmatprep.subr.mxu0 0.0
    %1446 = vmatpush2.msra.mxu0 0.0
    %1447 = vmatprep.subr.mxu0 0.0
    %1448 = vmatpush2.msra.mxu0 0.0
    %1449 = vmatprep.subr.mxu0 0.0
    %1450 = vmatpush2.msra.mxu0 0.0
    %1451 = vmatprep.subr.mxu0 0.0
    %1452 = vmatpush2.msra.mxu0 0.0
    %1453 = vmatprep.mubr.f32.mxu0 0.0
    %1454 = vmatmul.mubr.f32.gmra.mxu0 %v946
    %v1455 = vpop.f32.mrf.mxu0
    %v1456 = vadd.f32 %v1378, %v1455
    %v1457 = vpop.f32.mrf.mxu0
    %1458 = vmatprep.mubr.f32.mxu0 0.0
    %1459 = vmatmul.mubr.f32.gmra.mxu0 %v948
    %v1460 = vpop.f32.mrf.mxu0
    %v1461 = vadd.f32 %v1382, %v1460
    %v1462 = vpop.f32.mrf.mxu0
    %1463 = vdwg.mxu0
    %v1464 = vtanh.pop %v1456
    %v1465 = vtanh.pop %v1461
    %v1466 = vld [vmem:[#allocation2 + $0xf0] sm:$0xff]
    %v1467 = vld [vmem:[#allocation2 + $0xf8] sm:$0xff]
    %v1468 = vld [vmem:[#allocation2 + $0x100] sm:$0xff]
    %v1469 = vld [vmem:[#allocation2 + $0x108] sm:$0xff]
    %v1471 = vsel %vm90, %v1464, 0
    %v1474 = vsel %vm90, %v1465, 0
    %1476 = vmatprep.subr.mxu0 0.0
    %1477 = vmatpush1.msra.mxu0 0.0
    %1478 = vmatprep.subr.mxu0 0.0
    %1479 = vmatpush1.msra.mxu0 0.0
    %1480 = vmatprep.subr.mxu0 0.0
    %1481 = vmatpush1.msra.mxu0 0.0
    %1482 = vmatprep.subr.mxu0 0.0
    %1483 = vmatpush1.msra.mxu0 0.0
    %1484 = vmatprep.subr.mxu0 0.0
    %1485 = vmatpush1.msra.mxu0 0.0
    %1486 = vmatprep.subr.mxu0 0.0
    %1487 = vmatpush1.msra.mxu0 0.0
    %1488 = vmatprep.subr.mxu0 0.0
    %1489 = vmatpush1.msra.mxu0 0.0
    %1490 = vmatprep.subr.mxu0 0.0
    %1491 = vmatpush1.msra.mxu0 0.0
    %1492 = vmatprep.subr.mxu0 0.0
    %1493 = vmatpush1.msra.mxu0 0.0
    %1494 = vmatprep.subr.mxu0 0.0
    %1495 = vmatpush1.msra.mxu0 0.0
    %1496 = vmatprep.subr.mxu0 0.0
    %1497 = vmatpush1.msra.mxu0 0.0
    %1498 = vmatprep.subr.mxu0 0.0
    %1499 = vmatpush1.msra.mxu0 0.0
    %1500 = vmatprep.subr.mxu0 0.0
    %1501 = vmatpush1.msra.mxu0 %v1469
    %1502 = vmatprep.subr.mxu0 0.0
    %1503 = vmatpush1.msra.mxu0 %v1468
    %1504 = vmatprep.subr.mxu0 0.0
    %1505 = vmatpush1.msra.mxu0 %v1467
    %1506 = vmatprep.subr.mxu0 0.0
    %1507 = vmatpush1.msra.mxu0 %v1466
    %1508 = vmatprep.subr.mxu0 0.0
    %1509 = vmatpush2.msra.mxu0 0.0
    %1510 = vmatprep.subr.mxu0 0.0
    %1511 = vmatpush2.msra.mxu0 0.0
    %1512 = vmatprep.subr.mxu0 0.0
    %1513 = vmatpush2.msra.mxu0 0.0
    %1514 = vmatprep.subr.mxu0 0.0
    %1515 = vmatpush2.msra.mxu0 0.0
    %1516 = vmatprep.subr.mxu0 0.0
    %1517 = vmatpush2.msra.mxu0 0.0
    %1518 = vmatprep.subr.mxu0 0.0
    %1519 = vmatpush2.msra.mxu0 0.0
    %1520 = vmatprep.subr.mxu0 0.0
    %1521 = vmatpush2.msra.mxu0 0.0
    %1522 = vmatprep.subr.mxu0 0.0
    %1523 = vmatpush2.msra.mxu0 0.0
    %1524 = vmatprep.subr.mxu0 0.0
    %1525 = vmatpush2.msra.mxu0 0.0
    %1526 = vmatprep.subr.mxu0 0.0
    %1527 = vmatpush2.msra.mxu0 0.0
    %1528 = vmatprep.subr.mxu0 0.0
    %1529 = vmatpush2.msra.mxu0 0.0
    %1530 = vmatprep.subr.mxu0 0.0
    %1531 = vmatpush2.msra.mxu0 0.0
    %1532 = vmatprep.subr.mxu0 0.0
    %1533 = vmatpush2.msra.mxu0 0.0
    %1534 = vmatprep.subr.mxu0 0.0
    %1535 = vmatpush2.msra.mxu0 0.0
    %1536 = vmatprep.subr.mxu0 0.0
    %1537 = vmatpush2.msra.mxu0 0.0
    %1538 = vmatprep.subr.mxu0 0.0
    %1539 = vmatpush2.msra.mxu0 0.0
    %1540 = vmatprep.mubr.f32.mxu0 0.0
    %1541 = vmatmul.mubr.f32.gmra.mxu0 %v1471
    %v1542 = vpop.f32.mrf.mxu0
    %v1543 = vadd.f32 0.0, %v1542
    %v1544 = vpop.f32.mrf.mxu0
    %1545 = vmatprep.mubr.f32.mxu0 0.0
    %1546 = vmatmul.mubr.f32.gmra.mxu0 %v1474
    %v1547 = vpop.f32.mrf.mxu0
    %v1548 = vadd.f32 0.0, %v1547
    %v1549 = vpop.f32.mrf.mxu0
    %1550 = vdwg.mxu0
    %v1551 = vtanh.pop %v1543
    %v1552 = vtanh.pop %v1548
    %v1553 = vld [vmem:[#allocation2 + $0x110] sm:$0xff]
    %v1554 = vld [vmem:[#allocation2 + $0x118] sm:$0xff]
    %v1556 = vsel %vm49, %v1551, 0
    %v1559 = vsel %vm49, %v1552, 0
    %1561 = vmatprep.subr.mxu0 0.0
    %1562 = vmatpush1.msra.mxu0 0.0
    %1563 = vmatprep.subr.mxu0 0.0
    %1564 = vmatpush1.msra.mxu0 0.0
    %1565 = vmatprep.subr.mxu0 0.0
    %1566 = vmatpush1.msra.mxu0 0.0
    %1567 = vmatprep.subr.mxu0 0.0
    %1568 = vmatpush1.msra.mxu0 0.0
    %1569 = vmatprep.subr.mxu0 0.0
    %1570 = vmatpush1.msra.mxu0 0.0
    %1571 = vmatprep.subr.mxu0 0.0
    %1572 = vmatpush1.msra.mxu0 0.0
    %1573 = vmatprep.subr.mxu0 0.0
    %1574 = vmatpush1.msra.mxu0 0.0
    %1575 = vmatprep.subr.mxu0 0.0
    %1576 = vmatpush1.msra.mxu0 0.0
    %1577 = vmatprep.subr.mxu0 0.0
    %1578 = vmatpush1.msra.mxu0 0.0
    %1579 = vmatprep.subr.mxu0 0.0
    %1580 = vmatpush1.msra.mxu0 0.0
    %1581 = vmatprep.subr.mxu0 0.0
    %1582 = vmatpush1.msra.mxu0 0.0
    %1583 = vmatprep.subr.mxu0 0.0
    %1584 = vmatpush1.msra.mxu0 0.0
    %1585 = vmatprep.subr.mxu0 0.0
    %1586 = vmatpush1.msra.mxu0 0.0
    %1587 = vmatprep.subr.mxu0 0.0
    %1588 = vmatpush1.msra.mxu0 0.0
    %1589 = vmatprep.subr.mxu0 0.0
    %1590 = vmatpush1.msra.mxu0 %v1554
    %1591 = vmatprep.subr.mxu0 0.0
    %1592 = vmatpush1.msra.mxu0 %v1553
    %1593 = vmatprep.subr.mxu0 0.0
    %1594 = vmatpush2.msra.mxu0 0.0
    %1595 = vmatprep.subr.mxu0 0.0
    %1596 = vmatpush2.msra.mxu0 0.0
    %1597 = vmatprep.subr.mxu0 0.0
    %1598 = vmatpush2.msra.mxu0 0.0
    %1599 = vmatprep.subr.mxu0 0.0
    %1600 = vmatpush2.msra.mxu0 0.0
    %1601 = vmatprep.subr.mxu0 0.0
    %1602 = vmatpush2.msra.mxu0 0.0
    %1603 = vmatprep.subr.mxu0 0.0
    %1604 = vmatpush2.msra.mxu0 0.0
    %1605 = vmatprep.subr.mxu0 0.0
    %1606 = vmatpush2.msra.mxu0 0.0
    %1607 = vmatprep.subr.mxu0 0.0
    %1608 = vmatpush2.msra.mxu0 0.0
    %1609 = vmatprep.subr.mxu0 0.0
    %1610 = vmatpush2.msra.mxu0 0.0
    %1611 = vmatprep.subr.mxu0 0.0
    %1612 = vmatpush2.msra.mxu0 0.0
    %1613 = vmatprep.subr.mxu0 0.0
    %1614 = vmatpush2.msra.mxu0 0.0
    %1615 = vmatprep.subr.mxu0 0.0
    %1616 = vmatpush2.msra.mxu0 0.0
    %1617 = vmatprep.subr.mxu0 0.0
    %1618 = vmatpush2.msra.mxu0 0.0
    %1619 = vmatprep.subr.mxu0 0.0
    %1620 = vmatpush2.msra.mxu0 0.0
    %1621 = vmatprep.subr.mxu0 0.0
    %1622 = vmatpush2.msra.mxu0 0.0
    %1623 = vmatprep.subr.mxu0 0.0
    %1624 = vmatpush2.msra.mxu0 0.0
    %1625 = vmatprep.mubr.f32.mxu0 0.0
    %1626 = vmatmul.mubr.f32.gmra.mxu0 %v1556
    %v1627 = vpop.f32.mrf.mxu0
    %v1628 = vadd.f32 0.0, %v1627
    %v1629 = vpop.f32.mrf.mxu0
    %1630 = vmatprep.mubr.f32.mxu0 0.0
    %1631 = vmatmul.mubr.f32.gmra.mxu0 %v1559
    %v1632 = vpop.f32.mrf.mxu0
    %v1633 = vadd.f32 0.0, %v1632
    %v1634 = vpop.f32.mrf.mxu0
    %1635 = vdwg.mxu0
    %v1636 = vsel %vm1197, %v1628, -3.4028235e+38
    %v1637 = vsel %vm1198, %v1633, -3.4028235e+38
    %v1638 = vsel %vm1201, %v1636, -inf
    %v1639 = vrot.slane %v1638, 4
    %v1640 = vmax.f32 %v1638, %v1639
    %v1641 = vrot.slane %v1640, 2
    %v1642 = vmax.f32 %v1640, %v1641
    %v1643 = vrot.slane %v1642, 1
    %v1644 = vmax.f32 %v1642, %v1643
    %v1645 = vsel %vm1201, %v1637, -inf
    %v1646 = vrot.slane %v1645, 4
    %v1647 = vmax.f32 %v1645, %v1646
    %v1648 = vrot.slane %v1647, 2
    %v1649 = vmax.f32 %v1647, %v1648
    %v1650 = vrot.slane %v1649, 1
    %v1651 = vmax.f32 %v1649, %v1650
    %v1652 = vsub.f32 %v1636, %v1644
    %v1653 = vsub.f32 %v1637, %v1651
    %v1654 = vmul.f32 %v1652, 1.442695
    %v1655 = vpow.pop %v1654
    %v1656 = vmul.f32 %v1653, 1.442695
    %v1657 = vpow.pop %v1656
    %v1658 = vsel %vm1201, %v1655, 0.0
    %v1659 = vrot.slane %v1658, 4
    %v1660 = vadd.f32 %v1658, %v1659
    %v1661 = vrot.slane %v1660, 2
    %v1662 = vadd.f32 %v1660, %v1661
    %v1663 = vrot.slane %v1662, 1
    %v1664 = vadd.f32 %v1662, %v1663
    %v1665 = vsel %vm1201, %v1657, 0.0
    %v1666 = vrot.slane %v1665, 4
    %v1667 = vadd.f32 %v1665, %v1666
    %v1668 = vrot.slane %v1667, 2
    %v1669 = vadd.f32 %v1667, %v1668
    %v1670 = vrot.slane %v1669, 1
    %v1671 = vadd.f32 %v1669, %v1670
    %v1672 = vrcp.pop %v1664
    %v1673 = vrcp.pop %v1671
    %v1674 = vmul.f32 %v1655, %v1672
    %v1675 = vmul.f32 %v1657, %v1673
    %1677 = vset.pattern.permute.xlu0 0
    %1678 = vperm.xlu0 %1677, %v1674
    %v1679 = vpop.permute.xlu0 %1678
    %1682 = vset.pattern.permute.xlu0 0
    %1683 = vperm.xlu0 %1682, %v1675
    %v1684 = vpop.permute.xlu0 %1683
    %v1686 = vmul.f32 %v1679, %v819
    %v1687 = vmul.f32 %v1684, %v820
    %v1688 = vsel %vm1252, %v1686, 0.0
    %v1689 = vrot.slane %v1688, 4
    %v1690 = vadd.f32 %v1688, %v1689
    %v1691 = vrot.slane %v1690, 2
    %v1692 = vadd.f32 %v1690, %v1691
    %v1693 = vrot.slane %v1692, 1
    %v1694 = vadd.f32 %v1692, %v1693
    %v1695 = vsel %vm1252, %v1687, 0.0
    %v1696 = vrot.slane %v1695, 4
    %v1697 = vadd.f32 %v1695, %v1696
    %v1698 = vrot.slane %v1697, 2
    %v1699 = vadd.f32 %v1697, %v1698
    %v1700 = vrot.slane %v1699, 1
    %v1701 = vadd.f32 %v1699, %v1700
    %v1704 = vsel %vm1269, %v1701, %v1694
    %1705 = vrot.lane.b32.xlu0 %v1704, 32
    %v1706 = vpop.permute.xlu0 %1705
    %v1708 = vadd.f32 %v1274, %v1706
    %vm1709 = vcmask 254976
    %1710 = vst.msk [vmem:[#allocation5] sm:$0x3] %vm1709, %v1708
    // Predicated region
    $region22: #{tpu_custom_call.1} parent=1 // pred_check
      _
    $region23: #{tpu_custom_call.1} parent=1 // pred_check_branch
      %1712 = sbr.rel (0) target = $region25
    $region24: #{tpu_custom_call.1} parent=1 // pred_region
      %s1714 = ssub.s32 32, 32
      %1715 = vsyncadd [#allocation4], %s1714
      %s1717 = sshll.u32 [#allocation5], 4
      %s1718 = int_to_ptr.vmem [resolvable:$true] %s1717
      %1720 = dma.vmem_to_hbm [thread:$0]  %s1718, 32, %s4, [#allocation4]
    $region25: #{tpu_custom_call.1} parent=1 // pred_fallthru
      _
    // Predicated region
    $region26: #{tpu_custom_call.1} parent=1 // pred_check
      _
    $region27: #{tpu_custom_call.1} parent=1 // pred_check_branch
      %1722 = sbr.rel (0) target = $region29
    $region28: #{tpu_custom_call.1} parent=1 // pred_region
      %s1724 = ssub.s32 256, 256
      %1725 = vsyncadd [#allocation7], %s1724
      %s1726 = sshll.u32 [#allocation6], 4
      %s1727 = int_to_ptr.vmem [resolvable:$true] %s1726
      %1732 = dma.vmem_to_hbm [thread:$0]  %s1727, 256, %s5, [#allocation7], 128, 128, 8
    $region29: #{tpu_custom_call.1} parent=1 // pred_fallthru
      _
    // Predicated region
    $region30: #{tpu_custom_call.1} parent=1 // pred_check
      _
    $region31: #{tpu_custom_call.1} parent=1 // pred_check_branch
      %1734 = sbr.rel (0) target = $region33
    $region32: #{tpu_custom_call.1} parent=1 // pred_region
      %1735 = dma.done [#allocation4], 32
    $region33: #{tpu_custom_call.1} parent=1 // pred_fallthru
      _
    // Predicated region
    $region34: #{tpu_custom_call.1} parent=1 // pred_check
      _
    $region35: #{tpu_custom_call.1} parent=1 // pred_check_branch
      %1737 = sbr.rel (0) target = $region37
    $region36: #{tpu_custom_call.1} parent=1 // pred_region
      %1738 = dma.done [#allocation7], 256
    $region37: #{tpu_custom_call.1} parent=1 // pred_fallthru
      _
    %1739 = vsyncpa [#allocation3], 1
    %1740 = vsyncpa [#allocation4], 1
    %1741 = vsyncpa [#allocation7], 1

</llo_original>
